<compile_context>
chip_gen: v6e
topology: v6e:2x2x1
jax: 0.10.0
libtpu: 0.0.40
codegen_flags: <defaults>
</compile_context>

<pallas_src>
import functools

import jax
import jax.numpy as jnp
from jax import lax
from jax.experimental import pallas as pl
from jax.experimental.pallas import tpu as pltpu


def _axial_dwconv_kernel(x_ref, hw_ref, vw_ref, bhv_ref, pw_ref, pb_ref, o_ref,
                         *, kernel_length):
    """One batch element per grid step.

    x_ref  : (1, C, H, W)    VMEM  input (NCHW; W on lanes, H on sublanes)
    hw_ref : (C, K)          SMEM  horizontal depthwise taps (scalars)
    vw_ref : (C, K)          SMEM  vertical depthwise taps (scalars)
    bhv_ref: (C,)            SMEM  hb + vb (combined depthwise biases)
    pw_ref : (C, Cout)       SMEM  1x1 pointwise weights (scalars)
    pb_ref : (Cout,)         SMEM  pointwise bias
    o_ref  : (1, Cout, H, W) VMEM  output (last dim W -> lane-dense stores)
    """
    K = kernel_length
    P = K // 2
    _, C, H, W = x_ref.shape
    Cout = o_ref.shape[1]

    # Border masks for the zero-padded shifts. Hoisted: one iota/compare pair
    # per offset, shared by all channels (JAX does not CSE broadcasts).
    col = lax.broadcasted_iota(jnp.int32, (H, W), 1)   # lane index
    row = lax.broadcasted_iota(jnp.int32, (H, W), 0)   # sublane index
    wmask = {}
    hmask = {}
    for k in range(K):
        d = k - P
        if d != 0:
            wmask[d] = (col + d >= 0) & (col + d < W)
            hmask[d] = (row + d >= 0) & (row + d < H)

    # Depthwise horizontal + vertical convs with the residual and both biases
    # folded into a single accumulator, then ReLU. C is small and static, so a
    # plain Python loop keeps each tap weight a cheap SMEM scalar broadcast.
    y = []
    for c in range(C):
        xc = x_ref[0, c]                                # (H, W) f32
        acc = xc + bhv_ref[c]                           # residual + (hb + vb)
        for k in range(K):
            d = k - P
            if d == 0:
                acc = acc + xc * (hw_ref[c, k] + vw_ref[c, k])
            else:
                # horizontal tap: x[h, w + d] (zero outside) -> lane roll (XLU)
                sh = pltpu.roll(xc, shift=(-d) % W, axis=1)
                acc = acc + jnp.where(wmask[d], sh, 0.0) * hw_ref[c, k]
                # vertical tap: x[h + d, w] (zero outside) -> sublane roll (XLU)
                sv = pltpu.roll(xc, shift=(-d) % H, axis=0)
                acc = acc + jnp.where(hmask[d], sv, 0.0) * vw_ref[c, k]
        y.append(jnp.maximum(acc, 0.0))

    # 1x1 pointwise conv as Cout VPU broadcast-MACs; output last dim stays W.
    for co in range(Cout):
        out = y[0] * pw_ref[0, co] + pb_ref[co]
        for c in range(1, C):
            out = out + y[c] * pw_ref[c, co]
        o_ref[0, co] = out.astype(o_ref.dtype)


def axial_depthwise_conv(x_nchw, params, kernel_length=5):
    """x_nchw: (B, C, H, W) float32 (NCHW, native). Returns (B, Cout, H, W).

    params = (hw, hb, vw, vb, pw, pb):
      hw, vw: (C, K) depthwise taps;  hb, vb: (C,) depthwise biases
      pw: (C, Cout) 1x1 weights;      pb: (Cout,) pointwise bias
    """
    hw, hb, vw, vb, pw, pb = params
    B, C, H, W = x_nchw.shape
    Cout = pw.shape[1]

    # Pad spatial dims up to native (sublane, lane) multiples. Zero padding is
    # semantics-preserving for zero-padded convs; the pad region is sliced off.
    Hp = -(-H // 8) * 8
    Wp = -(-W // 128) * 128
    xk = x_nchw
    if (Hp, Wp) != (H, W):
        xk = jnp.pad(x_nchw, ((0, 0), (0, 0), (0, Hp - H), (0, Wp - W)))

    bias_hv = (hb + vb).astype(x_nchw.dtype)   # fold the two depthwise biases

    kernel = functools.partial(_axial_dwconv_kernel, kernel_length=kernel_length)
    smem_spec = pl.BlockSpec(memory_space=pltpu.MemorySpace.SMEM)

    out = pl.pallas_call(
        kernel,
        out_shape=jax.ShapeDtypeStruct((B, Cout, Hp, Wp), x_nchw.dtype),
        grid_spec=pltpu.PrefetchScalarGridSpec(
            num_scalar_prefetch=0,
            grid=(B,),                                  # >=2 parallel steps
            in_specs=[
                pl.BlockSpec((1, C, Hp, Wp), lambda b: (b, 0, 0, 0)),   # x
                smem_spec,   # hw   (C, K)
                smem_spec,   # vw   (C, K)
                smem_spec,   # hb+vb (C,)
                smem_spec,   # pw   (C, Cout)
                smem_spec,   # pb   (Cout,)
            ],
            out_specs=pl.BlockSpec((1, Cout, Hp, Wp), lambda b: (b, 0, 0, 0)),
        ),
        compiler_params=pltpu.CompilerParams(
            dimension_semantics=("parallel",),
            vmem_limit_bytes=32 * 1024 * 1024,
        ),
    )(xk, hw, vw, bias_hv, pw, pb)

    if (Hp, Wp) != (H, W):
        out = out[:, :, :H, :W]
    # TODO(synk): for very large images, additionally tile H into halo'd row
    # strips (extra grid axis) to stay within v7x's 64 MiB VMEM.
    return out


def _reference(x_nchw, params, kernel_length=5):
    """Pure-JAX reference matching the PyTorch module semantics (NCHW)."""
    hw, hb, vw, vb, pw, pb = params
    B, C, H, W = x_nchw.shape
    Cout = pw.shape[1]
    P = kernel_length // 2

    # depthwise horizontal (1, K) — PyTorch weight layout (C, 1, 1, K)
    hw_t = hw.reshape(C, 1, 1, kernel_length)
    h = lax.conv_general_dilated(
        x_nchw, hw_t, window_strides=(1, 1), padding=((0, 0), (P, P)),
        dimension_numbers=("NCHW", "OIHW", "NCHW"), feature_group_count=C)
    h = h + hb.reshape(1, C, 1, 1)

    # depthwise vertical (K, 1) — PyTorch weight layout (C, 1, K, 1)
    vw_t = vw.reshape(C, 1, kernel_length, 1)
    v = lax.conv_general_dilated(
        x_nchw, vw_t, window_strides=(1, 1), padding=((P, P), (0, 0)),
        dimension_numbers=("NCHW", "OIHW", "NCHW"), feature_group_count=C)
    v = v + vb.reshape(1, C, 1, 1)

    y = jnp.maximum(h + v + x_nchw, 0.0)

    # pointwise 1x1 — PyTorch weight layout (Cout, Cin, 1, 1); pw is (Cin, Cout)
    pw_t = jnp.transpose(pw, (1, 0)).reshape(Cout, C, 1, 1)
    out = lax.conv_general_dilated(
        y, pw_t, window_strides=(1, 1), padding=((0, 0), (0, 0)),
        dimension_numbers=("NCHW", "OIHW", "NCHW"))
    return out + pb.reshape(1, Cout, 1, 1)


if __name__ == "__main__":
    # Small shapes; W=128 so the lane axis is fully dense in the demo.
    B, Cin, Cout, H, W, K = 2, 4, 8, 16, 128, 5

    key = jax.random.PRNGKey(0)
    k_x, k_hw, k_hb, k_vw, k_vb, k_pw, k_pb = jax.random.split(key, 7)

    x = jax.random.normal(k_x, (B, Cin, H, W), dtype=jnp.float32)

    hw = 0.3 * jax.random.normal(k_hw, (Cin, K), dtype=jnp.float32)   # (1,K) dw
    hb = 0.1 * jax.random.normal(k_hb, (Cin,), dtype=jnp.float32)
    vw = 0.3 * jax.random.normal(k_vw, (Cin, K), dtype=jnp.float32)   # (K,1) dw
    vb = 0.1 * jax.random.normal(k_vb, (Cin,), dtype=jnp.float32)
    pw = 0.3 * jax.random.normal(k_pw, (Cin, Cout), dtype=jnp.float32)  # 1x1
    pb = 0.1 * jax.random.normal(k_pb, (Cout,), dtype=jnp.float32)

    params = (hw, hb, vw, vb, pw, pb)

    out = jax.block_until_ready(axial_depthwise_conv(x, params, kernel_length=K))
    ref = jax.block_until_ready(_reference(x, params, kernel_length=K))

    assert out.shape == (B, Cout, H, W), out.shape
    err = float(jnp.max(jnp.abs(out - ref)))
    assert jnp.allclose(out, ref, atol=1e-4, rtol=1e-4), err

    print("KERNEL_OK")
</pallas_src>

<mosaic_0001>
module attributes {stable_mosaic.version = 11 : i64} {
  func.func @_axial_dwconv_kernel(%arg0: i32, %arg1: memref<1x4x16x128xf32, #tpu.memory_space<vmem>>, %arg2: memref<4x5xf32, #tpu.memory_space<smem>>, %arg3: memref<4x5xf32, #tpu.memory_space<smem>>, %arg4: memref<4xf32, #tpu.memory_space<smem>>, %arg5: memref<4x8xf32, #tpu.memory_space<smem>>, %arg6: memref<8xf32, #tpu.memory_space<smem>>, %arg7: memref<1x8x16x128xf32, #tpu.memory_space<vmem>>) attributes {dimension_semantics = [#tpu.dimension_semantics<parallel>], iteration_bounds = array<i64: 2>, scalar_prefetch = 0 : i64, scratch_operands = 0 : i64, tpu.core_type = #tpu.core_type<tc>, window_params = [{transform_indices = @transform_0, window_bounds = array<i64: 1, 4, 16, 128>}, {transform_indices = @transform_1, window_bounds = array<i64: 4, 5>}, {transform_indices = @transform_2, window_bounds = array<i64: 4, 5>}, {transform_indices = @transform_3, window_bounds = array<i64: 4>}, {transform_indices = @transform_4, window_bounds = array<i64: 4, 8>}, {transform_indices = @transform_5, window_bounds = array<i64: 8>}, {transform_indices = @transform_6, window_bounds = array<i64: 1, 8, 16, 128>}]} {
    %0 = tpu.iota {dimensions = array<i32: 1>} : vector<16x128xi32>
    %1 = tpu.iota {dimensions = array<i32: 0>} : vector<16x128xi32>
    %c-2_i32 = arith.constant -2 : i32
    %2 = vector.broadcast %c-2_i32 : i32 to vector<16x128xi32>
    %3 = arith.addi %0, %2 : vector<16x128xi32>
    %c0_i32 = arith.constant 0 : i32
    %4 = vector.broadcast %c0_i32 : i32 to vector<16x128xi32>
    %5 = arith.cmpi sge, %3, %4 : vector<16x128xi32>
    %c-2_i32_0 = arith.constant -2 : i32
    %6 = vector.broadcast %c-2_i32_0 : i32 to vector<16x128xi32>
    %7 = arith.addi %0, %6 : vector<16x128xi32>
    %c128_i32 = arith.constant 128 : i32
    %8 = vector.broadcast %c128_i32 : i32 to vector<16x128xi32>
    %9 = arith.cmpi slt, %7, %8 : vector<16x128xi32>
    %10 = arith.andi %5, %9 : vector<16x128xi1>
    %c-2_i32_1 = arith.constant -2 : i32
    %11 = vector.broadcast %c-2_i32_1 : i32 to vector<16x128xi32>
    %12 = arith.addi %1, %11 : vector<16x128xi32>
    %c0_i32_2 = arith.constant 0 : i32
    %13 = vector.broadcast %c0_i32_2 : i32 to vector<16x128xi32>
    %14 = arith.cmpi sge, %12, %13 : vector<16x128xi32>
    %c-2_i32_3 = arith.constant -2 : i32
    %15 = vector.broadcast %c-2_i32_3 : i32 to vector<16x128xi32>
    %16 = arith.addi %1, %15 : vector<16x128xi32>
    %c16_i32 = arith.constant 16 : i32
    %17 = vector.broadcast %c16_i32 : i32 to vector<16x128xi32>
    %18 = arith.cmpi slt, %16, %17 : vector<16x128xi32>
    %19 = arith.andi %14, %18 : vector<16x128xi1>
    %c-1_i32 = arith.constant -1 : i32
    %20 = vector.broadcast %c-1_i32 : i32 to vector<16x128xi32>
    %21 = arith.addi %0, %20 : vector<16x128xi32>
    %c0_i32_4 = arith.constant 0 : i32
    %22 = vector.broadcast %c0_i32_4 : i32 to vector<16x128xi32>
    %23 = arith.cmpi sge, %21, %22 : vector<16x128xi32>
    %c-1_i32_5 = arith.constant -1 : i32
    %24 = vector.broadcast %c-1_i32_5 : i32 to vector<16x128xi32>
    %25 = arith.addi %0, %24 : vector<16x128xi32>
    %c128_i32_6 = arith.constant 128 : i32
    %26 = vector.broadcast %c128_i32_6 : i32 to vector<16x128xi32>
    %27 = arith.cmpi slt, %25, %26 : vector<16x128xi32>
    %28 = arith.andi %23, %27 : vector<16x128xi1>
    %c-1_i32_7 = arith.constant -1 : i32
    %29 = vector.broadcast %c-1_i32_7 : i32 to vector<16x128xi32>
    %30 = arith.addi %1, %29 : vector<16x128xi32>
    %c0_i32_8 = arith.constant 0 : i32
    %31 = vector.broadcast %c0_i32_8 : i32 to vector<16x128xi32>
    %32 = arith.cmpi sge, %30, %31 : vector<16x128xi32>
    %c-1_i32_9 = arith.constant -1 : i32
    %33 = vector.broadcast %c-1_i32_9 : i32 to vector<16x128xi32>
    %34 = arith.addi %1, %33 : vector<16x128xi32>
    %c16_i32_10 = arith.constant 16 : i32
    %35 = vector.broadcast %c16_i32_10 : i32 to vector<16x128xi32>
    %36 = arith.cmpi slt, %34, %35 : vector<16x128xi32>
    %37 = arith.andi %32, %36 : vector<16x128xi1>
    %c1_i32 = arith.constant 1 : i32
    %38 = vector.broadcast %c1_i32 : i32 to vector<16x128xi32>
    %39 = arith.addi %0, %38 : vector<16x128xi32>
    %c0_i32_11 = arith.constant 0 : i32
    %40 = vector.broadcast %c0_i32_11 : i32 to vector<16x128xi32>
    %41 = arith.cmpi sge, %39, %40 : vector<16x128xi32>
    %c1_i32_12 = arith.constant 1 : i32
    %42 = vector.broadcast %c1_i32_12 : i32 to vector<16x128xi32>
    %43 = arith.addi %0, %42 : vector<16x128xi32>
    %c128_i32_13 = arith.constant 128 : i32
    %44 = vector.broadcast %c128_i32_13 : i32 to vector<16x128xi32>
    %45 = arith.cmpi slt, %43, %44 : vector<16x128xi32>
    %46 = arith.andi %41, %45 : vector<16x128xi1>
    %c1_i32_14 = arith.constant 1 : i32
    %47 = vector.broadcast %c1_i32_14 : i32 to vector<16x128xi32>
    %48 = arith.addi %1, %47 : vector<16x128xi32>
    %c0_i32_15 = arith.constant 0 : i32
    %49 = vector.broadcast %c0_i32_15 : i32 to vector<16x128xi32>
    %50 = arith.cmpi sge, %48, %49 : vector<16x128xi32>
    %c1_i32_16 = arith.constant 1 : i32
    %51 = vector.broadcast %c1_i32_16 : i32 to vector<16x128xi32>
    %52 = arith.addi %1, %51 : vector<16x128xi32>
    %c16_i32_17 = arith.constant 16 : i32
    %53 = vector.broadcast %c16_i32_17 : i32 to vector<16x128xi32>
    %54 = arith.cmpi slt, %52, %53 : vector<16x128xi32>
    %55 = arith.andi %50, %54 : vector<16x128xi1>
    %c2_i32 = arith.constant 2 : i32
    %56 = vector.broadcast %c2_i32 : i32 to vector<16x128xi32>
    %57 = arith.addi %0, %56 : vector<16x128xi32>
    %c0_i32_18 = arith.constant 0 : i32
    %58 = vector.broadcast %c0_i32_18 : i32 to vector<16x128xi32>
    %59 = arith.cmpi sge, %57, %58 : vector<16x128xi32>
    %c2_i32_19 = arith.constant 2 : i32
    %60 = vector.broadcast %c2_i32_19 : i32 to vector<16x128xi32>
    %61 = arith.addi %0, %60 : vector<16x128xi32>
    %c128_i32_20 = arith.constant 128 : i32
    %62 = vector.broadcast %c128_i32_20 : i32 to vector<16x128xi32>
    %63 = arith.cmpi slt, %61, %62 : vector<16x128xi32>
    %64 = arith.andi %59, %63 : vector<16x128xi1>
    %c2_i32_21 = arith.constant 2 : i32
    %65 = vector.broadcast %c2_i32_21 : i32 to vector<16x128xi32>
    %66 = arith.addi %1, %65 : vector<16x128xi32>
    %c0_i32_22 = arith.constant 0 : i32
    %67 = vector.broadcast %c0_i32_22 : i32 to vector<16x128xi32>
    %68 = arith.cmpi sge, %66, %67 : vector<16x128xi32>
    %c2_i32_23 = arith.constant 2 : i32
    %69 = vector.broadcast %c2_i32_23 : i32 to vector<16x128xi32>
    %70 = arith.addi %1, %69 : vector<16x128xi32>
    %c16_i32_24 = arith.constant 16 : i32
    %71 = vector.broadcast %c16_i32_24 : i32 to vector<16x128xi32>
    %72 = arith.cmpi slt, %70, %71 : vector<16x128xi32>
    %73 = arith.andi %68, %72 : vector<16x128xi1>
    %c0 = arith.constant 0 : index
    %c0_25 = arith.constant 0 : index
    %c0_26 = arith.constant 0 : index
    %c0_27 = arith.constant 0 : index
    %74 = vector.load %arg1[%c0, %c0_25, %c0_26, %c0_27] : memref<1x4x16x128xf32, #tpu.memory_space<vmem>>, vector<1x1x16x128xf32>
    %75 = vector.shape_cast %74 : vector<1x1x16x128xf32> to vector<16x128xf32>
    %c0_28 = arith.constant 0 : index
    %76 = memref.load %arg4[%c0_28] : memref<4xf32, #tpu.memory_space<smem>>
    %77 = vector.broadcast %76 : f32 to vector<16x128xf32>
    %78 = arith.addf %75, %77 : vector<16x128xf32>
    %c2_i32_29 = arith.constant 2 : i32
    %79 = tpu.dynamic_rotate %75 by %c2_i32_29 dim 1 : vector<16x128xf32>, i32 -> vector<16x128xf32>
    %cst = arith.constant 0.000000e+00 : f32
    %80 = vector.broadcast %cst : f32 to vector<16x128xf32>
    %81 = arith.select %10, %79, %80 : vector<16x128xi1>, vector<16x128xf32>
    %c0_30 = arith.constant 0 : index
    %c0_31 = arith.constant 0 : index
    %82 = memref.load %arg2[%c0_30, %c0_31] : memref<4x5xf32, #tpu.memory_space<smem>>
    %83 = vector.broadcast %82 : f32 to vector<16x128xf32>
    %84 = arith.mulf %81, %83 : vector<16x128xf32>
    %85 = arith.addf %78, %84 : vector<16x128xf32>
    %c2_i32_32 = arith.constant 2 : i32
    %86 = tpu.dynamic_rotate %75 by %c2_i32_32 dim 0 : vector<16x128xf32>, i32 -> vector<16x128xf32>
    %cst_33 = arith.constant 0.000000e+00 : f32
    %87 = vector.broadcast %cst_33 : f32 to vector<16x128xf32>
    %88 = arith.select %19, %86, %87 : vector<16x128xi1>, vector<16x128xf32>
    %c0_34 = arith.constant 0 : index
    %c0_35 = arith.constant 0 : index
    %89 = memref.load %arg3[%c0_34, %c0_35] : memref<4x5xf32, #tpu.memory_space<smem>>
    %90 = vector.broadcast %89 : f32 to vector<16x128xf32>
    %91 = arith.mulf %88, %90 : vector<16x128xf32>
    %92 = arith.addf %85, %91 : vector<16x128xf32>
    %c1_i32_36 = arith.constant 1 : i32
    %93 = tpu.dynamic_rotate %75 by %c1_i32_36 dim 1 : vector<16x128xf32>, i32 -> vector<16x128xf32>
    %cst_37 = arith.constant 0.000000e+00 : f32
    %94 = vector.broadcast %cst_37 : f32 to vector<16x128xf32>
    %95 = arith.select %28, %93, %94 : vector<16x128xi1>, vector<16x128xf32>
    %c0_38 = arith.constant 0 : index
    %c1 = arith.constant 1 : index
    %96 = memref.load %arg2[%c0_38, %c1] : memref<4x5xf32, #tpu.memory_space<smem>>
    %97 = vector.broadcast %96 : f32 to vector<16x128xf32>
    %98 = arith.mulf %95, %97 : vector<16x128xf32>
    %99 = arith.addf %92, %98 : vector<16x128xf32>
    %c1_i32_39 = arith.constant 1 : i32
    %100 = tpu.dynamic_rotate %75 by %c1_i32_39 dim 0 : vector<16x128xf32>, i32 -> vector<16x128xf32>
    %cst_40 = arith.constant 0.000000e+00 : f32
    %101 = vector.broadcast %cst_40 : f32 to vector<16x128xf32>
    %102 = arith.select %37, %100, %101 : vector<16x128xi1>, vector<16x128xf32>
    %c0_41 = arith.constant 0 : index
    %c1_42 = arith.constant 1 : index
    %103 = memref.load %arg3[%c0_41, %c1_42] : memref<4x5xf32, #tpu.memory_space<smem>>
    %104 = vector.broadcast %103 : f32 to vector<16x128xf32>
    %105 = arith.mulf %102, %104 : vector<16x128xf32>
    %106 = arith.addf %99, %105 : vector<16x128xf32>
    %c0_43 = arith.constant 0 : index
    %c2 = arith.constant 2 : index
    %107 = memref.load %arg2[%c0_43, %c2] : memref<4x5xf32, #tpu.memory_space<smem>>
    %c0_44 = arith.constant 0 : index
    %c2_45 = arith.constant 2 : index
    %108 = memref.load %arg3[%c0_44, %c2_45] : memref<4x5xf32, #tpu.memory_space<smem>>
    %109 = arith.addf %107, %108 : f32
    %110 = vector.broadcast %109 : f32 to vector<16x128xf32>
    %111 = arith.mulf %75, %110 : vector<16x128xf32>
    %112 = arith.addf %106, %111 : vector<16x128xf32>
    %c127_i32 = arith.constant 127 : i32
    %113 = tpu.dynamic_rotate %75 by %c127_i32 dim 1 : vector<16x128xf32>, i32 -> vector<16x128xf32>
    %cst_46 = arith.constant 0.000000e+00 : f32
    %114 = vector.broadcast %cst_46 : f32 to vector<16x128xf32>
    %115 = arith.select %46, %113, %114 : vector<16x128xi1>, vector<16x128xf32>
    %c0_47 = arith.constant 0 : index
    %c3 = arith.constant 3 : index
    %116 = memref.load %arg2[%c0_47, %c3] : memref<4x5xf32, #tpu.memory_space<smem>>
    %117 = vector.broadcast %116 : f32 to vector<16x128xf32>
    %118 = arith.mulf %115, %117 : vector<16x128xf32>
    %119 = arith.addf %112, %118 : vector<16x128xf32>
    %c15_i32 = arith.constant 15 : i32
    %120 = tpu.dynamic_rotate %75 by %c15_i32 dim 0 : vector<16x128xf32>, i32 -> vector<16x128xf32>
    %cst_48 = arith.constant 0.000000e+00 : f32
    %121 = vector.broadcast %cst_48 : f32 to vector<16x128xf32>
    %122 = arith.select %55, %120, %121 : vector<16x128xi1>, vector<16x128xf32>
    %c0_49 = arith.constant 0 : index
    %c3_50 = arith.constant 3 : index
    %123 = memref.load %arg3[%c0_49, %c3_50] : memref<4x5xf32, #tpu.memory_space<smem>>
    %124 = vector.broadcast %123 : f32 to vector<16x128xf32>
    %125 = arith.mulf %122, %124 : vector<16x128xf32>
    %126 = arith.addf %119, %125 : vector<16x128xf32>
    %c126_i32 = arith.constant 126 : i32
    %127 = tpu.dynamic_rotate %75 by %c126_i32 dim 1 : vector<16x128xf32>, i32 -> vector<16x128xf32>
    %cst_51 = arith.constant 0.000000e+00 : f32
    %128 = vector.broadcast %cst_51 : f32 to vector<16x128xf32>
    %129 = arith.select %64, %127, %128 : vector<16x128xi1>, vector<16x128xf32>
    %c0_52 = arith.constant 0 : index
    %c4 = arith.constant 4 : index
    %130 = memref.load %arg2[%c0_52, %c4] : memref<4x5xf32, #tpu.memory_space<smem>>
    %131 = vector.broadcast %130 : f32 to vector<16x128xf32>
    %132 = arith.mulf %129, %131 : vector<16x128xf32>
    %133 = arith.addf %126, %132 : vector<16x128xf32>
    %c14_i32 = arith.constant 14 : i32
    %134 = tpu.dynamic_rotate %75 by %c14_i32 dim 0 : vector<16x128xf32>, i32 -> vector<16x128xf32>
    %cst_53 = arith.constant 0.000000e+00 : f32
    %135 = vector.broadcast %cst_53 : f32 to vector<16x128xf32>
    %136 = arith.select %73, %134, %135 : vector<16x128xi1>, vector<16x128xf32>
    %c0_54 = arith.constant 0 : index
    %c4_55 = arith.constant 4 : index
    %137 = memref.load %arg3[%c0_54, %c4_55] : memref<4x5xf32, #tpu.memory_space<smem>>
    %138 = vector.broadcast %137 : f32 to vector<16x128xf32>
    %139 = arith.mulf %136, %138 : vector<16x128xf32>
    %140 = arith.addf %133, %139 : vector<16x128xf32>
    %cst_56 = arith.constant 0.000000e+00 : f32
    %141 = vector.broadcast %cst_56 : f32 to vector<16x128xf32>
    %142 = arith.maximumf %140, %141 : vector<16x128xf32>
    %c0_57 = arith.constant 0 : index
    %c1_58 = arith.constant 1 : index
    %c0_59 = arith.constant 0 : index
    %c0_60 = arith.constant 0 : index
    %143 = vector.load %arg1[%c0_57, %c1_58, %c0_59, %c0_60] : memref<1x4x16x128xf32, #tpu.memory_space<vmem>>, vector<1x1x16x128xf32>
    %144 = vector.shape_cast %143 : vector<1x1x16x128xf32> to vector<16x128xf32>
    %c1_61 = arith.constant 1 : index
    %145 = memref.load %arg4[%c1_61] : memref<4xf32, #tpu.memory_space<smem>>
    %146 = vector.broadcast %145 : f32 to vector<16x128xf32>
    %147 = arith.addf %144, %146 : vector<16x128xf32>
    %c2_i32_62 = arith.constant 2 : i32
    %148 = tpu.dynamic_rotate %144 by %c2_i32_62 dim 1 : vector<16x128xf32>, i32 -> vector<16x128xf32>
    %cst_63 = arith.constant 0.000000e+00 : f32
    %149 = vector.broadcast %cst_63 : f32 to vector<16x128xf32>
    %150 = arith.select %10, %148, %149 : vector<16x128xi1>, vector<16x128xf32>
    %c1_64 = arith.constant 1 : index
    %c0_65 = arith.constant 0 : index
    %151 = memref.load %arg2[%c1_64, %c0_65] : memref<4x5xf32, #tpu.memory_space<smem>>
    %152 = vector.broadcast %151 : f32 to vector<16x128xf32>
    %153 = arith.mulf %150, %152 : vector<16x128xf32>
    %154 = arith.addf %147, %153 : vector<16x128xf32>
    %c2_i32_66 = arith.constant 2 : i32
    %155 = tpu.dynamic_rotate %144 by %c2_i32_66 dim 0 : vector<16x128xf32>, i32 -> vector<16x128xf32>
    %cst_67 = arith.constant 0.000000e+00 : f32
    %156 = vector.broadcast %cst_67 : f32 to vector<16x128xf32>
    %157 = arith.select %19, %155, %156 : vector<16x128xi1>, vector<16x128xf32>
    %c1_68 = arith.constant 1 : index
    %c0_69 = arith.constant 0 : index
    %158 = memref.load %arg3[%c1_68, %c0_69] : memref<4x5xf32, #tpu.memory_space<smem>>
    %159 = vector.broadcast %158 : f32 to vector<16x128xf32>
    %160 = arith.mulf %157, %159 : vector<16x128xf32>
    %161 = arith.addf %154, %160 : vector<16x128xf32>
    %c1_i32_70 = arith.constant 1 : i32
    %162 = tpu.dynamic_rotate %144 by %c1_i32_70 dim 1 : vector<16x128xf32>, i32 -> vector<16x128xf32>
    %cst_71 = arith.constant 0.000000e+00 : f32
    %163 = vector.broadcast %cst_71 : f32 to vector<16x128xf32>
    %164 = arith.select %28, %162, %163 : vector<16x128xi1>, vector<16x128xf32>
    %c1_72 = arith.constant 1 : index
    %c1_73 = arith.constant 1 : index
    %165 = memref.load %arg2[%c1_72, %c1_73] : memref<4x5xf32, #tpu.memory_space<smem>>
    %166 = vector.broadcast %165 : f32 to vector<16x128xf32>
    %167 = arith.mulf %164, %166 : vector<16x128xf32>
    %168 = arith.addf %161, %167 : vector<16x128xf32>
    %c1_i32_74 = arith.constant 1 : i32
    %169 = tpu.dynamic_rotate %144 by %c1_i32_74 dim 0 : vector<16x128xf32>, i32 -> vector<16x128xf32>
    %cst_75 = arith.constant 0.000000e+00 : f32
    %170 = vector.broadcast %cst_75 : f32 to vector<16x128xf32>
    %171 = arith.select %37, %169, %170 : vector<16x128xi1>, vector<16x128xf32>
    %c1_76 = arith.constant 1 : index
    %c1_77 = arith.constant 1 : index
    %172 = memref.load %arg3[%c1_76, %c1_77] : memref<4x5xf32, #tpu.memory_space<smem>>
    %173 = vector.broadcast %172 : f32 to vector<16x128xf32>
    %174 = arith.mulf %171, %173 : vector<16x128xf32>
    %175 = arith.addf %168, %174 : vector<16x128xf32>
    %c1_78 = arith.constant 1 : index
    %c2_79 = arith.constant 2 : index
    %176 = memref.load %arg2[%c1_78, %c2_79] : memref<4x5xf32, #tpu.memory_space<smem>>
    %c1_80 = arith.constant 1 : index
    %c2_81 = arith.constant 2 : index
    %177 = memref.load %arg3[%c1_80, %c2_81] : memref<4x5xf32, #tpu.memory_space<smem>>
    %178 = arith.addf %176, %177 : f32
    %179 = vector.broadcast %178 : f32 to vector<16x128xf32>
    %180 = arith.mulf %144, %179 : vector<16x128xf32>
    %181 = arith.addf %175, %180 : vector<16x128xf32>
    %c127_i32_82 = arith.constant 127 : i32
    %182 = tpu.dynamic_rotate %144 by %c127_i32_82 dim 1 : vector<16x128xf32>, i32 -> vector<16x128xf32>
    %cst_83 = arith.constant 0.000000e+00 : f32
    %183 = vector.broadcast %cst_83 : f32 to vector<16x128xf32>
    %184 = arith.select %46, %182, %183 : vector<16x128xi1>, vector<16x128xf32>
    %c1_84 = arith.constant 1 : index
    %c3_85 = arith.constant 3 : index
    %185 = memref.load %arg2[%c1_84, %c3_85] : memref<4x5xf32, #tpu.memory_space<smem>>
    %186 = vector.broadcast %185 : f32 to vector<16x128xf32>
    %187 = arith.mulf %184, %186 : vector<16x128xf32>
    %188 = arith.addf %181, %187 : vector<16x128xf32>
    %c15_i32_86 = arith.constant 15 : i32
    %189 = tpu.dynamic_rotate %144 by %c15_i32_86 dim 0 : vector<16x128xf32>, i32 -> vector<16x128xf32>
    %cst_87 = arith.constant 0.000000e+00 : f32
    %190 = vector.broadcast %cst_87 : f32 to vector<16x128xf32>
    %191 = arith.select %55, %189, %190 : vector<16x128xi1>, vector<16x128xf32>
    %c1_88 = arith.constant 1 : index
    %c3_89 = arith.constant 3 : index
    %192 = memref.load %arg3[%c1_88, %c3_89] : memref<4x5xf32, #tpu.memory_space<smem>>
    %193 = vector.broadcast %192 : f32 to vector<16x128xf32>
    %194 = arith.mulf %191, %193 : vector<16x128xf32>
    %195 = arith.addf %188, %194 : vector<16x128xf32>
    %c126_i32_90 = arith.constant 126 : i32
    %196 = tpu.dynamic_rotate %144 by %c126_i32_90 dim 1 : vector<16x128xf32>, i32 -> vector<16x128xf32>
    %cst_91 = arith.constant 0.000000e+00 : f32
    %197 = vector.broadcast %cst_91 : f32 to vector<16x128xf32>
    %198 = arith.select %64, %196, %197 : vector<16x128xi1>, vector<16x128xf32>
    %c1_92 = arith.constant 1 : index
    %c4_93 = arith.constant 4 : index
    %199 = memref.load %arg2[%c1_92, %c4_93] : memref<4x5xf32, #tpu.memory_space<smem>>
    %200 = vector.broadcast %199 : f32 to vector<16x128xf32>
    %201 = arith.mulf %198, %200 : vector<16x128xf32>
    %202 = arith.addf %195, %201 : vector<16x128xf32>
    %c14_i32_94 = arith.constant 14 : i32
    %203 = tpu.dynamic_rotate %144 by %c14_i32_94 dim 0 : vector<16x128xf32>, i32 -> vector<16x128xf32>
    %cst_95 = arith.constant 0.000000e+00 : f32
    %204 = vector.broadcast %cst_95 : f32 to vector<16x128xf32>
    %205 = arith.select %73, %203, %204 : vector<16x128xi1>, vector<16x128xf32>
    %c1_96 = arith.constant 1 : index
    %c4_97 = arith.constant 4 : index
    %206 = memref.load %arg3[%c1_96, %c4_97] : memref<4x5xf32, #tpu.memory_space<smem>>
    %207 = vector.broadcast %206 : f32 to vector<16x128xf32>
    %208 = arith.mulf %205, %207 : vector<16x128xf32>
    %209 = arith.addf %202, %208 : vector<16x128xf32>
    %cst_98 = arith.constant 0.000000e+00 : f32
    %210 = vector.broadcast %cst_98 : f32 to vector<16x128xf32>
    %211 = arith.maximumf %209, %210 : vector<16x128xf32>
    %c0_99 = arith.constant 0 : index
    %c2_100 = arith.constant 2 : index
    %c0_101 = arith.constant 0 : index
    %c0_102 = arith.constant 0 : index
    %212 = vector.load %arg1[%c0_99, %c2_100, %c0_101, %c0_102] : memref<1x4x16x128xf32, #tpu.memory_space<vmem>>, vector<1x1x16x128xf32>
    %213 = vector.shape_cast %212 : vector<1x1x16x128xf32> to vector<16x128xf32>
    %c2_103 = arith.constant 2 : index
    %214 = memref.load %arg4[%c2_103] : memref<4xf32, #tpu.memory_space<smem>>
    %215 = vector.broadcast %214 : f32 to vector<16x128xf32>
    %216 = arith.addf %213, %215 : vector<16x128xf32>
    %c2_i32_104 = arith.constant 2 : i32
    %217 = tpu.dynamic_rotate %213 by %c2_i32_104 dim 1 : vector<16x128xf32>, i32 -> vector<16x128xf32>
    %cst_105 = arith.constant 0.000000e+00 : f32
    %218 = vector.broadcast %cst_105 : f32 to vector<16x128xf32>
    %219 = arith.select %10, %217, %218 : vector<16x128xi1>, vector<16x128xf32>
    %c2_106 = arith.constant 2 : index
    %c0_107 = arith.constant 0 : index
    %220 = memref.load %arg2[%c2_106, %c0_107] : memref<4x5xf32, #tpu.memory_space<smem>>
    %221 = vector.broadcast %220 : f32 to vector<16x128xf32>
    %222 = arith.mulf %219, %221 : vector<16x128xf32>
    %223 = arith.addf %216, %222 : vector<16x128xf32>
    %c2_i32_108 = arith.constant 2 : i32
    %224 = tpu.dynamic_rotate %213 by %c2_i32_108 dim 0 : vector<16x128xf32>, i32 -> vector<16x128xf32>
    %cst_109 = arith.constant 0.000000e+00 : f32
    %225 = vector.broadcast %cst_109 : f32 to vector<16x128xf32>
    %226 = arith.select %19, %224, %225 : vector<16x128xi1>, vector<16x128xf32>
    %c2_110 = arith.constant 2 : index
    %c0_111 = arith.constant 0 : index
    %227 = memref.load %arg3[%c2_110, %c0_111] : memref<4x5xf32, #tpu.memory_space<smem>>
    %228 = vector.broadcast %227 : f32 to vector<16x128xf32>
    %229 = arith.mulf %226, %228 : vector<16x128xf32>
    %230 = arith.addf %223, %229 : vector<16x128xf32>
    %c1_i32_112 = arith.constant 1 : i32
    %231 = tpu.dynamic_rotate %213 by %c1_i32_112 dim 1 : vector<16x128xf32>, i32 -> vector<16x128xf32>
    %cst_113 = arith.constant 0.000000e+00 : f32
    %232 = vector.broadcast %cst_113 : f32 to vector<16x128xf32>
    %233 = arith.select %28, %231, %232 : vector<16x128xi1>, vector<16x128xf32>
    %c2_114 = arith.constant 2 : index
    %c1_115 = arith.constant 1 : index
    %234 = memref.load %arg2[%c2_114, %c1_115] : memref<4x5xf32, #tpu.memory_space<smem>>
    %235 = vector.broadcast %234 : f32 to vector<16x128xf32>
    %236 = arith.mulf %233, %235 : vector<16x128xf32>
    %237 = arith.addf %230, %236 : vector<16x128xf32>
    %c1_i32_116 = arith.constant 1 : i32
    %238 = tpu.dynamic_rotate %213 by %c1_i32_116 dim 0 : vector<16x128xf32>, i32 -> vector<16x128xf32>
    %cst_117 = arith.constant 0.000000e+00 : f32
    %239 = vector.broadcast %cst_117 : f32 to vector<16x128xf32>
    %240 = arith.select %37, %238, %239 : vector<16x128xi1>, vector<16x128xf32>
    %c2_118 = arith.constant 2 : index
    %c1_119 = arith.constant 1 : index
    %241 = memref.load %arg3[%c2_118, %c1_119] : memref<4x5xf32, #tpu.memory_space<smem>>
    %242 = vector.broadcast %241 : f32 to vector<16x128xf32>
    %243 = arith.mulf %240, %242 : vector<16x128xf32>
    %244 = arith.addf %237, %243 : vector<16x128xf32>
    %c2_120 = arith.constant 2 : index
    %c2_121 = arith.constant 2 : index
    %245 = memref.load %arg2[%c2_120, %c2_121] : memref<4x5xf32, #tpu.memory_space<smem>>
    %c2_122 = arith.constant 2 : index
    %c2_123 = arith.constant 2 : index
    %246 = memref.load %arg3[%c2_122, %c2_123] : memref<4x5xf32, #tpu.memory_space<smem>>
    %247 = arith.addf %245, %246 : f32
    %248 = vector.broadcast %247 : f32 to vector<16x128xf32>
    %249 = arith.mulf %213, %248 : vector<16x128xf32>
    %250 = arith.addf %244, %249 : vector<16x128xf32>
    %c127_i32_124 = arith.constant 127 : i32
    %251 = tpu.dynamic_rotate %213 by %c127_i32_124 dim 1 : vector<16x128xf32>, i32 -> vector<16x128xf32>
    %cst_125 = arith.constant 0.000000e+00 : f32
    %252 = vector.broadcast %cst_125 : f32 to vector<16x128xf32>
    %253 = arith.select %46, %251, %252 : vector<16x128xi1>, vector<16x128xf32>
    %c2_126 = arith.constant 2 : index
    %c3_127 = arith.constant 3 : index
    %254 = memref.load %arg2[%c2_126, %c3_127] : memref<4x5xf32, #tpu.memory_space<smem>>
    %255 = vector.broadcast %254 : f32 to vector<16x128xf32>
    %256 = arith.mulf %253, %255 : vector<16x128xf32>
    %257 = arith.addf %250, %256 : vector<16x128xf32>
    %c15_i32_128 = arith.constant 15 : i32
    %258 = tpu.dynamic_rotate %213 by %c15_i32_128 dim 0 : vector<16x128xf32>, i32 -> vector<16x128xf32>
    %cst_129 = arith.constant 0.000000e+00 : f32
    %259 = vector.broadcast %cst_129 : f32 to vector<16x128xf32>
    %260 = arith.select %55, %258, %259 : vector<16x128xi1>, vector<16x128xf32>
    %c2_130 = arith.constant 2 : index
    %c3_131 = arith.constant 3 : index
    %261 = memref.load %arg3[%c2_130, %c3_131] : memref<4x5xf32, #tpu.memory_space<smem>>
    %262 = vector.broadcast %261 : f32 to vector<16x128xf32>
    %263 = arith.mulf %260, %262 : vector<16x128xf32>
    %264 = arith.addf %257, %263 : vector<16x128xf32>
    %c126_i32_132 = arith.constant 126 : i32
    %265 = tpu.dynamic_rotate %213 by %c126_i32_132 dim 1 : vector<16x128xf32>, i32 -> vector<16x128xf32>
    %cst_133 = arith.constant 0.000000e+00 : f32
    %266 = vector.broadcast %cst_133 : f32 to vector<16x128xf32>
    %267 = arith.select %64, %265, %266 : vector<16x128xi1>, vector<16x128xf32>
    %c2_134 = arith.constant 2 : index
    %c4_135 = arith.constant 4 : index
    %268 = memref.load %arg2[%c2_134, %c4_135] : memref<4x5xf32, #tpu.memory_space<smem>>
    %269 = vector.broadcast %268 : f32 to vector<16x128xf32>
    %270 = arith.mulf %267, %269 : vector<16x128xf32>
    %271 = arith.addf %264, %270 : vector<16x128xf32>
    %c14_i32_136 = arith.constant 14 : i32
    %272 = tpu.dynamic_rotate %213 by %c14_i32_136 dim 0 : vector<16x128xf32>, i32 -> vector<16x128xf32>
    %cst_137 = arith.constant 0.000000e+00 : f32
    %273 = vector.broadcast %cst_137 : f32 to vector<16x128xf32>
    %274 = arith.select %73, %272, %273 : vector<16x128xi1>, vector<16x128xf32>
    %c2_138 = arith.constant 2 : index
    %c4_139 = arith.constant 4 : index
    %275 = memref.load %arg3[%c2_138, %c4_139] : memref<4x5xf32, #tpu.memory_space<smem>>
    %276 = vector.broadcast %275 : f32 to vector<16x128xf32>
    %277 = arith.mulf %274, %276 : vector<16x128xf32>
    %278 = arith.addf %271, %277 : vector<16x128xf32>
    %cst_140 = arith.constant 0.000000e+00 : f32
    %279 = vector.broadcast %cst_140 : f32 to vector<16x128xf32>
    %280 = arith.maximumf %278, %279 : vector<16x128xf32>
    %c0_141 = arith.constant 0 : index
    %c3_142 = arith.constant 3 : index
    %c0_143 = arith.constant 0 : index
    %c0_144 = arith.constant 0 : index
    %281 = vector.load %arg1[%c0_141, %c3_142, %c0_143, %c0_144] : memref<1x4x16x128xf32, #tpu.memory_space<vmem>>, vector<1x1x16x128xf32>
    %282 = vector.shape_cast %281 : vector<1x1x16x128xf32> to vector<16x128xf32>
    %c3_145 = arith.constant 3 : index
    %283 = memref.load %arg4[%c3_145] : memref<4xf32, #tpu.memory_space<smem>>
    %284 = vector.broadcast %283 : f32 to vector<16x128xf32>
    %285 = arith.addf %282, %284 : vector<16x128xf32>
    %c2_i32_146 = arith.constant 2 : i32
    %286 = tpu.dynamic_rotate %282 by %c2_i32_146 dim 1 : vector<16x128xf32>, i32 -> vector<16x128xf32>
    %cst_147 = arith.constant 0.000000e+00 : f32
    %287 = vector.broadcast %cst_147 : f32 to vector<16x128xf32>
    %288 = arith.select %10, %286, %287 : vector<16x128xi1>, vector<16x128xf32>
    %c3_148 = arith.constant 3 : index
    %c0_149 = arith.constant 0 : index
    %289 = memref.load %arg2[%c3_148, %c0_149] : memref<4x5xf32, #tpu.memory_space<smem>>
    %290 = vector.broadcast %289 : f32 to vector<16x128xf32>
    %291 = arith.mulf %288, %290 : vector<16x128xf32>
    %292 = arith.addf %285, %291 : vector<16x128xf32>
    %c2_i32_150 = arith.constant 2 : i32
    %293 = tpu.dynamic_rotate %282 by %c2_i32_150 dim 0 : vector<16x128xf32>, i32 -> vector<16x128xf32>
    %cst_151 = arith.constant 0.000000e+00 : f32
    %294 = vector.broadcast %cst_151 : f32 to vector<16x128xf32>
    %295 = arith.select %19, %293, %294 : vector<16x128xi1>, vector<16x128xf32>
    %c3_152 = arith.constant 3 : index
    %c0_153 = arith.constant 0 : index
    %296 = memref.load %arg3[%c3_152, %c0_153] : memref<4x5xf32, #tpu.memory_space<smem>>
    %297 = vector.broadcast %296 : f32 to vector<16x128xf32>
    %298 = arith.mulf %295, %297 : vector<16x128xf32>
    %299 = arith.addf %292, %298 : vector<16x128xf32>
    %c1_i32_154 = arith.constant 1 : i32
    %300 = tpu.dynamic_rotate %282 by %c1_i32_154 dim 1 : vector<16x128xf32>, i32 -> vector<16x128xf32>
    %cst_155 = arith.constant 0.000000e+00 : f32
    %301 = vector.broadcast %cst_155 : f32 to vector<16x128xf32>
    %302 = arith.select %28, %300, %301 : vector<16x128xi1>, vector<16x128xf32>
    %c3_156 = arith.constant 3 : index
    %c1_157 = arith.constant 1 : index
    %303 = memref.load %arg2[%c3_156, %c1_157] : memref<4x5xf32, #tpu.memory_space<smem>>
    %304 = vector.broadcast %303 : f32 to vector<16x128xf32>
    %305 = arith.mulf %302, %304 : vector<16x128xf32>
    %306 = arith.addf %299, %305 : vector<16x128xf32>
    %c1_i32_158 = arith.constant 1 : i32
    %307 = tpu.dynamic_rotate %282 by %c1_i32_158 dim 0 : vector<16x128xf32>, i32 -> vector<16x128xf32>
    %cst_159 = arith.constant 0.000000e+00 : f32
    %308 = vector.broadcast %cst_159 : f32 to vector<16x128xf32>
    %309 = arith.select %37, %307, %308 : vector<16x128xi1>, vector<16x128xf32>
    %c3_160 = arith.constant 3 : index
    %c1_161 = arith.constant 1 : index
    %310 = memref.load %arg3[%c3_160, %c1_161] : memref<4x5xf32, #tpu.memory_space<smem>>
    %311 = vector.broadcast %310 : f32 to vector<16x128xf32>
    %312 = arith.mulf %309, %311 : vector<16x128xf32>
    %313 = arith.addf %306, %312 : vector<16x128xf32>
    %c3_162 = arith.constant 3 : index
    %c2_163 = arith.constant 2 : index
    %314 = memref.load %arg2[%c3_162, %c2_163] : memref<4x5xf32, #tpu.memory_space<smem>>
    %c3_164 = arith.constant 3 : index
    %c2_165 = arith.constant 2 : index
    %315 = memref.load %arg3[%c3_164, %c2_165] : memref<4x5xf32, #tpu.memory_space<smem>>
    %316 = arith.addf %314, %315 : f32
    %317 = vector.broadcast %316 : f32 to vector<16x128xf32>
    %318 = arith.mulf %282, %317 : vector<16x128xf32>
    %319 = arith.addf %313, %318 : vector<16x128xf32>
    %c127_i32_166 = arith.constant 127 : i32
    %320 = tpu.dynamic_rotate %282 by %c127_i32_166 dim 1 : vector<16x128xf32>, i32 -> vector<16x128xf32>
    %cst_167 = arith.constant 0.000000e+00 : f32
    %321 = vector.broadcast %cst_167 : f32 to vector<16x128xf32>
    %322 = arith.select %46, %320, %321 : vector<16x128xi1>, vector<16x128xf32>
    %c3_168 = arith.constant 3 : index
    %c3_169 = arith.constant 3 : index
    %323 = memref.load %arg2[%c3_168, %c3_169] : memref<4x5xf32, #tpu.memory_space<smem>>
    %324 = vector.broadcast %323 : f32 to vector<16x128xf32>
    %325 = arith.mulf %322, %324 : vector<16x128xf32>
    %326 = arith.addf %319, %325 : vector<16x128xf32>
    %c15_i32_170 = arith.constant 15 : i32
    %327 = tpu.dynamic_rotate %282 by %c15_i32_170 dim 0 : vector<16x128xf32>, i32 -> vector<16x128xf32>
    %cst_171 = arith.constant 0.000000e+00 : f32
    %328 = vector.broadcast %cst_171 : f32 to vector<16x128xf32>
    %329 = arith.select %55, %327, %328 : vector<16x128xi1>, vector<16x128xf32>
    %c3_172 = arith.constant 3 : index
    %c3_173 = arith.constant 3 : index
    %330 = memref.load %arg3[%c3_172, %c3_173] : memref<4x5xf32, #tpu.memory_space<smem>>
    %331 = vector.broadcast %330 : f32 to vector<16x128xf32>
    %332 = arith.mulf %329, %331 : vector<16x128xf32>
    %333 = arith.addf %326, %332 : vector<16x128xf32>
    %c126_i32_174 = arith.constant 126 : i32
    %334 = tpu.dynamic_rotate %282 by %c126_i32_174 dim 1 : vector<16x128xf32>, i32 -> vector<16x128xf32>
    %cst_175 = arith.constant 0.000000e+00 : f32
    %335 = vector.broadcast %cst_175 : f32 to vector<16x128xf32>
    %336 = arith.select %64, %334, %335 : vector<16x128xi1>, vector<16x128xf32>
    %c3_176 = arith.constant 3 : index
    %c4_177 = arith.constant 4 : index
    %337 = memref.load %arg2[%c3_176, %c4_177] : memref<4x5xf32, #tpu.memory_space<smem>>
    %338 = vector.broadcast %337 : f32 to vector<16x128xf32>
    %339 = arith.mulf %336, %338 : vector<16x128xf32>
    %340 = arith.addf %333, %339 : vector<16x128xf32>
    %c14_i32_178 = arith.constant 14 : i32
    %341 = tpu.dynamic_rotate %282 by %c14_i32_178 dim 0 : vector<16x128xf32>, i32 -> vector<16x128xf32>
    %cst_179 = arith.constant 0.000000e+00 : f32
    %342 = vector.broadcast %cst_179 : f32 to vector<16x128xf32>
    %343 = arith.select %73, %341, %342 : vector<16x128xi1>, vector<16x128xf32>
    %c3_180 = arith.constant 3 : index
    %c4_181 = arith.constant 4 : index
    %344 = memref.load %arg3[%c3_180, %c4_181] : memref<4x5xf32, #tpu.memory_space<smem>>
    %345 = vector.broadcast %344 : f32 to vector<16x128xf32>
    %346 = arith.mulf %343, %345 : vector<16x128xf32>
    %347 = arith.addf %340, %346 : vector<16x128xf32>
    %cst_182 = arith.constant 0.000000e+00 : f32
    %348 = vector.broadcast %cst_182 : f32 to vector<16x128xf32>
    %349 = arith.maximumf %347, %348 : vector<16x128xf32>
    %c0_183 = arith.constant 0 : index
    %c0_184 = arith.constant 0 : index
    %350 = memref.load %arg5[%c0_183, %c0_184] : memref<4x8xf32, #tpu.memory_space<smem>>
    %351 = vector.broadcast %350 : f32 to vector<16x128xf32>
    %352 = arith.mulf %142, %351 : vector<16x128xf32>
    %c0_185 = arith.constant 0 : index
    %353 = memref.load %arg6[%c0_185] : memref<8xf32, #tpu.memory_space<smem>>
    %354 = vector.broadcast %353 : f32 to vector<16x128xf32>
    %355 = arith.addf %352, %354 : vector<16x128xf32>
    %c1_186 = arith.constant 1 : index
    %c0_187 = arith.constant 0 : index
    %356 = memref.load %arg5[%c1_186, %c0_187] : memref<4x8xf32, #tpu.memory_space<smem>>
    %357 = vector.broadcast %356 : f32 to vector<16x128xf32>
    %358 = arith.mulf %211, %357 : vector<16x128xf32>
    %359 = arith.addf %355, %358 : vector<16x128xf32>
    %c2_188 = arith.constant 2 : index
    %c0_189 = arith.constant 0 : index
    %360 = memref.load %arg5[%c2_188, %c0_189] : memref<4x8xf32, #tpu.memory_space<smem>>
    %361 = vector.broadcast %360 : f32 to vector<16x128xf32>
    %362 = arith.mulf %280, %361 : vector<16x128xf32>
    %363 = arith.addf %359, %362 : vector<16x128xf32>
    %c3_190 = arith.constant 3 : index
    %c0_191 = arith.constant 0 : index
    %364 = memref.load %arg5[%c3_190, %c0_191] : memref<4x8xf32, #tpu.memory_space<smem>>
    %365 = vector.broadcast %364 : f32 to vector<16x128xf32>
    %366 = arith.mulf %349, %365 : vector<16x128xf32>
    %367 = arith.addf %363, %366 : vector<16x128xf32>
    %c0_192 = arith.constant 0 : index
    %c0_193 = arith.constant 0 : index
    %c0_194 = arith.constant 0 : index
    %c0_195 = arith.constant 0 : index
    %368 = vector.load %arg7[%c0_192, %c0_193, %c0_194, %c0_195] : memref<1x8x16x128xf32, #tpu.memory_space<vmem>>, vector<1x1x16x128xf32>
    %369 = vector.shape_cast %368 : vector<1x1x16x128xf32> to vector<16x128xf32>
    %370 = vector.shape_cast %367 : vector<16x128xf32> to vector<1x1x16x128xf32>
    tpu.vector_store %arg7[%c0_192, %c0_193, %c0_194, %c0_195], %370 {strides = array<i32>} : memref<1x8x16x128xf32, #tpu.memory_space<vmem>>, vector<1x1x16x128xf32>,
    %c0_196 = arith.constant 0 : index
    %c1_197 = arith.constant 1 : index
    %371 = memref.load %arg5[%c0_196, %c1_197] : memref<4x8xf32, #tpu.memory_space<smem>>
    %372 = vector.broadcast %371 : f32 to vector<16x128xf32>
    %373 = arith.mulf %142, %372 : vector<16x128xf32>
    %c1_198 = arith.constant 1 : index
    %374 = memref.load %arg6[%c1_198] : memref<8xf32, #tpu.memory_space<smem>>
    %375 = vector.broadcast %374 : f32 to vector<16x128xf32>
    %376 = arith.addf %373, %375 : vector<16x128xf32>
    %c1_199 = arith.constant 1 : index
    %c1_200 = arith.constant 1 : index
    %377 = memref.load %arg5[%c1_199, %c1_200] : memref<4x8xf32, #tpu.memory_space<smem>>
    %378 = vector.broadcast %377 : f32 to vector<16x128xf32>
    %379 = arith.mulf %211, %378 : vector<16x128xf32>
    %380 = arith.addf %376, %379 : vector<16x128xf32>
    %c2_201 = arith.constant 2 : index
    %c1_202 = arith.constant 1 : index
    %381 = memref.load %arg5[%c2_201, %c1_202] : memref<4x8xf32, #tpu.memory_space<smem>>
    %382 = vector.broadcast %381 : f32 to vector<16x128xf32>
    %383 = arith.mulf %280, %382 : vector<16x128xf32>
    %384 = arith.addf %380, %383 : vector<16x128xf32>
    %c3_203 = arith.constant 3 : index
    %c1_204 = arith.constant 1 : index
    %385 = memref.load %arg5[%c3_203, %c1_204] : memref<4x8xf32, #tpu.memory_space<smem>>
    %386 = vector.broadcast %385 : f32 to vector<16x128xf32>
    %387 = arith.mulf %349, %386 : vector<16x128xf32>
    %388 = arith.addf %384, %387 : vector<16x128xf32>
    %c0_205 = arith.constant 0 : index
    %c1_206 = arith.constant 1 : index
    %c0_207 = arith.constant 0 : index
    %c0_208 = arith.constant 0 : index
    %389 = vector.load %arg7[%c0_205, %c1_206, %c0_207, %c0_208] : memref<1x8x16x128xf32, #tpu.memory_space<vmem>>, vector<1x1x16x128xf32>
    %390 = vector.shape_cast %389 : vector<1x1x16x128xf32> to vector<16x128xf32>
    %391 = vector.shape_cast %388 : vector<16x128xf32> to vector<1x1x16x128xf32>
    tpu.vector_store %arg7[%c0_205, %c1_206, %c0_207, %c0_208], %391 {strides = array<i32>} : memref<1x8x16x128xf32, #tpu.memory_space<vmem>>, vector<1x1x16x128xf32>,
    %c0_209 = arith.constant 0 : index
    %c2_210 = arith.constant 2 : index
    %392 = memref.load %arg5[%c0_209, %c2_210] : memref<4x8xf32, #tpu.memory_space<smem>>
    %393 = vector.broadcast %392 : f32 to vector<16x128xf32>
    %394 = arith.mulf %142, %393 : vector<16x128xf32>
    %c2_211 = arith.constant 2 : index
    %395 = memref.load %arg6[%c2_211] : memref<8xf32, #tpu.memory_space<smem>>
    %396 = vector.broadcast %395 : f32 to vector<16x128xf32>
    %397 = arith.addf %394, %396 : vector<16x128xf32>
    %c1_212 = arith.constant 1 : index
    %c2_213 = arith.constant 2 : index
    %398 = memref.load %arg5[%c1_212, %c2_213] : memref<4x8xf32, #tpu.memory_space<smem>>
    %399 = vector.broadcast %398 : f32 to vector<16x128xf32>
    %400 = arith.mulf %211, %399 : vector<16x128xf32>
    %401 = arith.addf %397, %400 : vector<16x128xf32>
    %c2_214 = arith.constant 2 : index
    %c2_215 = arith.constant 2 : index
    %402 = memref.load %arg5[%c2_214, %c2_215] : memref<4x8xf32, #tpu.memory_space<smem>>
    %403 = vector.broadcast %402 : f32 to vector<16x128xf32>
    %404 = arith.mulf %280, %403 : vector<16x128xf32>
    %405 = arith.addf %401, %404 : vector<16x128xf32>
    %c3_216 = arith.constant 3 : index
    %c2_217 = arith.constant 2 : index
    %406 = memref.load %arg5[%c3_216, %c2_217] : memref<4x8xf32, #tpu.memory_space<smem>>
    %407 = vector.broadcast %406 : f32 to vector<16x128xf32>
    %408 = arith.mulf %349, %407 : vector<16x128xf32>
    %409 = arith.addf %405, %408 : vector<16x128xf32>
    %c0_218 = arith.constant 0 : index
    %c2_219 = arith.constant 2 : index
    %c0_220 = arith.constant 0 : index
    %c0_221 = arith.constant 0 : index
    %410 = vector.load %arg7[%c0_218, %c2_219, %c0_220, %c0_221] : memref<1x8x16x128xf32, #tpu.memory_space<vmem>>, vector<1x1x16x128xf32>
    %411 = vector.shape_cast %410 : vector<1x1x16x128xf32> to vector<16x128xf32>
    %412 = vector.shape_cast %409 : vector<16x128xf32> to vector<1x1x16x128xf32>
    tpu.vector_store %arg7[%c0_218, %c2_219, %c0_220, %c0_221], %412 {strides = array<i32>} : memref<1x8x16x128xf32, #tpu.memory_space<vmem>>, vector<1x1x16x128xf32>,
    %c0_222 = arith.constant 0 : index
    %c3_223 = arith.constant 3 : index
    %413 = memref.load %arg5[%c0_222, %c3_223] : memref<4x8xf32, #tpu.memory_space<smem>>
    %414 = vector.broadcast %413 : f32 to vector<16x128xf32>
    %415 = arith.mulf %142, %414 : vector<16x128xf32>
    %c3_224 = arith.constant 3 : index
    %416 = memref.load %arg6[%c3_224] : memref<8xf32, #tpu.memory_space<smem>>
    %417 = vector.broadcast %416 : f32 to vector<16x128xf32>
    %418 = arith.addf %415, %417 : vector<16x128xf32>
    %c1_225 = arith.constant 1 : index
    %c3_226 = arith.constant 3 : index
    %419 = memref.load %arg5[%c1_225, %c3_226] : memref<4x8xf32, #tpu.memory_space<smem>>
    %420 = vector.broadcast %419 : f32 to vector<16x128xf32>
    %421 = arith.mulf %211, %420 : vector<16x128xf32>
    %422 = arith.addf %418, %421 : vector<16x128xf32>
    %c2_227 = arith.constant 2 : index
    %c3_228 = arith.constant 3 : index
    %423 = memref.load %arg5[%c2_227, %c3_228] : memref<4x8xf32, #tpu.memory_space<smem>>
    %424 = vector.broadcast %423 : f32 to vector<16x128xf32>
    %425 = arith.mulf %280, %424 : vector<16x128xf32>
    %426 = arith.addf %422, %425 : vector<16x128xf32>
    %c3_229 = arith.constant 3 : index
    %c3_230 = arith.constant 3 : index
    %427 = memref.load %arg5[%c3_229, %c3_230] : memref<4x8xf32, #tpu.memory_space<smem>>
    %428 = vector.broadcast %427 : f32 to vector<16x128xf32>
    %429 = arith.mulf %349, %428 : vector<16x128xf32>
    %430 = arith.addf %426, %429 : vector<16x128xf32>
    %c0_231 = arith.constant 0 : index
    %c3_232 = arith.constant 3 : index
    %c0_233 = arith.constant 0 : index
    %c0_234 = arith.constant 0 : index
    %431 = vector.load %arg7[%c0_231, %c3_232, %c0_233, %c0_234] : memref<1x8x16x128xf32, #tpu.memory_space<vmem>>, vector<1x1x16x128xf32>
    %432 = vector.shape_cast %431 : vector<1x1x16x128xf32> to vector<16x128xf32>
    %433 = vector.shape_cast %430 : vector<16x128xf32> to vector<1x1x16x128xf32>
    tpu.vector_store %arg7[%c0_231, %c3_232, %c0_233, %c0_234], %433 {strides = array<i32>} : memref<1x8x16x128xf32, #tpu.memory_space<vmem>>, vector<1x1x16x128xf32>,
    %c0_235 = arith.constant 0 : index
    %c4_236 = arith.constant 4 : index
    %434 = memref.load %arg5[%c0_235, %c4_236] : memref<4x8xf32, #tpu.memory_space<smem>>
    %435 = vector.broadcast %434 : f32 to vector<16x128xf32>
    %436 = arith.mulf %142, %435 : vector<16x128xf32>
    %c4_237 = arith.constant 4 : index
    %437 = memref.load %arg6[%c4_237] : memref<8xf32, #tpu.memory_space<smem>>
    %438 = vector.broadcast %437 : f32 to vector<16x128xf32>
    %439 = arith.addf %436, %438 : vector<16x128xf32>
    %c1_238 = arith.constant 1 : index
    %c4_239 = arith.constant 4 : index
    %440 = memref.load %arg5[%c1_238, %c4_239] : memref<4x8xf32, #tpu.memory_space<smem>>
    %441 = vector.broadcast %440 : f32 to vector<16x128xf32>
    %442 = arith.mulf %211, %441 : vector<16x128xf32>
    %443 = arith.addf %439, %442 : vector<16x128xf32>
    %c2_240 = arith.constant 2 : index
    %c4_241 = arith.constant 4 : index
    %444 = memref.load %arg5[%c2_240, %c4_241] : memref<4x8xf32, #tpu.memory_space<smem>>
    %445 = vector.broadcast %444 : f32 to vector<16x128xf32>
    %446 = arith.mulf %280, %445 : vector<16x128xf32>
    %447 = arith.addf %443, %446 : vector<16x128xf32>
    %c3_242 = arith.constant 3 : index
    %c4_243 = arith.constant 4 : index
    %448 = memref.load %arg5[%c3_242, %c4_243] : memref<4x8xf32, #tpu.memory_space<smem>>
    %449 = vector.broadcast %448 : f32 to vector<16x128xf32>
    %450 = arith.mulf %349, %449 : vector<16x128xf32>
    %451 = arith.addf %447, %450 : vector<16x128xf32>
    %c0_244 = arith.constant 0 : index
    %c4_245 = arith.constant 4 : index
    %c0_246 = arith.constant 0 : index
    %c0_247 = arith.constant 0 : index
    %452 = vector.load %arg7[%c0_244, %c4_245, %c0_246, %c0_247] : memref<1x8x16x128xf32, #tpu.memory_space<vmem>>, vector<1x1x16x128xf32>
    %453 = vector.shape_cast %452 : vector<1x1x16x128xf32> to vector<16x128xf32>
    %454 = vector.shape_cast %451 : vector<16x128xf32> to vector<1x1x16x128xf32>
    tpu.vector_store %arg7[%c0_244, %c4_245, %c0_246, %c0_247], %454 {strides = array<i32>} : memref<1x8x16x128xf32, #tpu.memory_space<vmem>>, vector<1x1x16x128xf32>,
    %c0_248 = arith.constant 0 : index
    %c5 = arith.constant 5 : index
    %455 = memref.load %arg5[%c0_248, %c5] : memref<4x8xf32, #tpu.memory_space<smem>>
    %456 = vector.broadcast %455 : f32 to vector<16x128xf32>
    %457 = arith.mulf %142, %456 : vector<16x128xf32>
    %c5_249 = arith.constant 5 : index
    %458 = memref.load %arg6[%c5_249] : memref<8xf32, #tpu.memory_space<smem>>
    %459 = vector.broadcast %458 : f32 to vector<16x128xf32>
    %460 = arith.addf %457, %459 : vector<16x128xf32>
    %c1_250 = arith.constant 1 : index
    %c5_251 = arith.constant 5 : index
    %461 = memref.load %arg5[%c1_250, %c5_251] : memref<4x8xf32, #tpu.memory_space<smem>>
    %462 = vector.broadcast %461 : f32 to vector<16x128xf32>
    %463 = arith.mulf %211, %462 : vector<16x128xf32>
    %464 = arith.addf %460, %463 : vector<16x128xf32>
    %c2_252 = arith.constant 2 : index
    %c5_253 = arith.constant 5 : index
    %465 = memref.load %arg5[%c2_252, %c5_253] : memref<4x8xf32, #tpu.memory_space<smem>>
    %466 = vector.broadcast %465 : f32 to vector<16x128xf32>
    %467 = arith.mulf %280, %466 : vector<16x128xf32>
    %468 = arith.addf %464, %467 : vector<16x128xf32>
    %c3_254 = arith.constant 3 : index
    %c5_255 = arith.constant 5 : index
    %469 = memref.load %arg5[%c3_254, %c5_255] : memref<4x8xf32, #tpu.memory_space<smem>>
    %470 = vector.broadcast %469 : f32 to vector<16x128xf32>
    %471 = arith.mulf %349, %470 : vector<16x128xf32>
    %472 = arith.addf %468, %471 : vector<16x128xf32>
    %c0_256 = arith.constant 0 : index
    %c5_257 = arith.constant 5 : index
    %c0_258 = arith.constant 0 : index
    %c0_259 = arith.constant 0 : index
    %473 = vector.load %arg7[%c0_256, %c5_257, %c0_258, %c0_259] : memref<1x8x16x128xf32, #tpu.memory_space<vmem>>, vector<1x1x16x128xf32>
    %474 = vector.shape_cast %473 : vector<1x1x16x128xf32> to vector<16x128xf32>
    %475 = vector.shape_cast %472 : vector<16x128xf32> to vector<1x1x16x128xf32>
    tpu.vector_store %arg7[%c0_256, %c5_257, %c0_258, %c0_259], %475 {strides = array<i32>} : memref<1x8x16x128xf32, #tpu.memory_space<vmem>>, vector<1x1x16x128xf32>,
    %c0_260 = arith.constant 0 : index
    %c6 = arith.constant 6 : index
    %476 = memref.load %arg5[%c0_260, %c6] : memref<4x8xf32, #tpu.memory_space<smem>>
    %477 = vector.broadcast %476 : f32 to vector<16x128xf32>
    %478 = arith.mulf %142, %477 : vector<16x128xf32>
    %c6_261 = arith.constant 6 : index
    %479 = memref.load %arg6[%c6_261] : memref<8xf32, #tpu.memory_space<smem>>
    %480 = vector.broadcast %479 : f32 to vector<16x128xf32>
    %481 = arith.addf %478, %480 : vector<16x128xf32>
    %c1_262 = arith.constant 1 : index
    %c6_263 = arith.constant 6 : index
    %482 = memref.load %arg5[%c1_262, %c6_263] : memref<4x8xf32, #tpu.memory_space<smem>>
    %483 = vector.broadcast %482 : f32 to vector<16x128xf32>
    %484 = arith.mulf %211, %483 : vector<16x128xf32>
    %485 = arith.addf %481, %484 : vector<16x128xf32>
    %c2_264 = arith.constant 2 : index
    %c6_265 = arith.constant 6 : index
    %486 = memref.load %arg5[%c2_264, %c6_265] : memref<4x8xf32, #tpu.memory_space<smem>>
    %487 = vector.broadcast %486 : f32 to vector<16x128xf32>
    %488 = arith.mulf %280, %487 : vector<16x128xf32>
    %489 = arith.addf %485, %488 : vector<16x128xf32>
    %c3_266 = arith.constant 3 : index
    %c6_267 = arith.constant 6 : index
    %490 = memref.load %arg5[%c3_266, %c6_267] : memref<4x8xf32, #tpu.memory_space<smem>>
    %491 = vector.broadcast %490 : f32 to vector<16x128xf32>
    %492 = arith.mulf %349, %491 : vector<16x128xf32>
    %493 = arith.addf %489, %492 : vector<16x128xf32>
    %c0_268 = arith.constant 0 : index
    %c6_269 = arith.constant 6 : index
    %c0_270 = arith.constant 0 : index
    %c0_271 = arith.constant 0 : index
    %494 = vector.load %arg7[%c0_268, %c6_269, %c0_270, %c0_271] : memref<1x8x16x128xf32, #tpu.memory_space<vmem>>, vector<1x1x16x128xf32>
    %495 = vector.shape_cast %494 : vector<1x1x16x128xf32> to vector<16x128xf32>
    %496 = vector.shape_cast %493 : vector<16x128xf32> to vector<1x1x16x128xf32>
    tpu.vector_store %arg7[%c0_268, %c6_269, %c0_270, %c0_271], %496 {strides = array<i32>} : memref<1x8x16x128xf32, #tpu.memory_space<vmem>>, vector<1x1x16x128xf32>,
    %c0_272 = arith.constant 0 : index
    %c7 = arith.constant 7 : index
    %497 = memref.load %arg5[%c0_272, %c7] : memref<4x8xf32, #tpu.memory_space<smem>>
    %498 = vector.broadcast %497 : f32 to vector<16x128xf32>
    %499 = arith.mulf %142, %498 : vector<16x128xf32>
    %c7_273 = arith.constant 7 : index
    %500 = memref.load %arg6[%c7_273] : memref<8xf32, #tpu.memory_space<smem>>
    %501 = vector.broadcast %500 : f32 to vector<16x128xf32>
    %502 = arith.addf %499, %501 : vector<16x128xf32>
    %c1_274 = arith.constant 1 : index
    %c7_275 = arith.constant 7 : index
    %503 = memref.load %arg5[%c1_274, %c7_275] : memref<4x8xf32, #tpu.memory_space<smem>>
    %504 = vector.broadcast %503 : f32 to vector<16x128xf32>
    %505 = arith.mulf %211, %504 : vector<16x128xf32>
    %506 = arith.addf %502, %505 : vector<16x128xf32>
    %c2_276 = arith.constant 2 : index
    %c7_277 = arith.constant 7 : index
    %507 = memref.load %arg5[%c2_276, %c7_277] : memref<4x8xf32, #tpu.memory_space<smem>>
    %508 = vector.broadcast %507 : f32 to vector<16x128xf32>
    %509 = arith.mulf %280, %508 : vector<16x128xf32>
    %510 = arith.addf %506, %509 : vector<16x128xf32>
    %c3_278 = arith.constant 3 : index
    %c7_279 = arith.constant 7 : index
    %511 = memref.load %arg5[%c3_278, %c7_279] : memref<4x8xf32, #tpu.memory_space<smem>>
    %512 = vector.broadcast %511 : f32 to vector<16x128xf32>
    %513 = arith.mulf %349, %512 : vector<16x128xf32>
    %514 = arith.addf %510, %513 : vector<16x128xf32>
    %c0_280 = arith.constant 0 : index
    %c7_281 = arith.constant 7 : index
    %c0_282 = arith.constant 0 : index
    %c0_283 = arith.constant 0 : index
    %515 = vector.load %arg7[%c0_280, %c7_281, %c0_282, %c0_283] : memref<1x8x16x128xf32, #tpu.memory_space<vmem>>, vector<1x1x16x128xf32>
    %516 = vector.shape_cast %515 : vector<1x1x16x128xf32> to vector<16x128xf32>
    %517 = vector.shape_cast %514 : vector<16x128xf32> to vector<1x1x16x128xf32>
    tpu.vector_store %arg7[%c0_280, %c7_281, %c0_282, %c0_283], %517 {strides = array<i32>} : memref<1x8x16x128xf32, #tpu.memory_space<vmem>>, vector<1x1x16x128xf32>,
    return
  }
  func.func @transform_0(%arg0: i32) -> (i32, i32, i32, i32) {
    %c0_i32 = arith.constant 0 : i32
    %c0_i32_0 = arith.constant 0 : i32
    %c0_i32_1 = arith.constant 0 : i32
    %c0_i32_2 = arith.constant 0 : i32
    return %arg0, %c0_i32, %c0_i32_0, %c0_i32_1 : i32, i32, i32, i32
  }
  func.func @transform_1(%arg0: i32) -> (i32, i32) {
    %c0_i32 = arith.constant 0 : i32
    %c0_i32_0 = arith.constant 0 : i32
    %c0_i32_1 = arith.constant 0 : i32
    return %c0_i32, %c0_i32_0 : i32, i32
  }
  func.func @transform_2(%arg0: i32) -> (i32, i32) {
    %c0_i32 = arith.constant 0 : i32
    %c0_i32_0 = arith.constant 0 : i32
    %c0_i32_1 = arith.constant 0 : i32
    return %c0_i32, %c0_i32_0 : i32, i32
  }
  func.func @transform_3(%arg0: i32) -> i32 {
    %c0_i32 = arith.constant 0 : i32
    %c0_i32_0 = arith.constant 0 : i32
    return %c0_i32 : i32
  }
  func.func @transform_4(%arg0: i32) -> (i32, i32) {
    %c0_i32 = arith.constant 0 : i32
    %c0_i32_0 = arith.constant 0 : i32
    %c0_i32_1 = arith.constant 0 : i32
    return %c0_i32, %c0_i32_0 : i32, i32
  }
  func.func @transform_5(%arg0: i32) -> i32 {
    %c0_i32 = arith.constant 0 : i32
    %c0_i32_0 = arith.constant 0 : i32
    return %c0_i32 : i32
  }
  func.func @transform_6(%arg0: i32) -> (i32, i32, i32, i32) {
    %c0_i32 = arith.constant 0 : i32
    %c0_i32_0 = arith.constant 0 : i32
    %c0_i32_1 = arith.constant 0 : i32
    %c0_i32_2 = arith.constant 0 : i32
    return %arg0, %c0_i32, %c0_i32_0, %c0_i32_1 : i32, i32, i32, i32
  }
}

</mosaic_0001>

<llo_original>
// kernel: tpu_custom_call.1
$region0: #{tpu_custom_call.1}
  #allocation0 [shape = 'u32[]', space=smem, size = 0x4, offset = 0x4, fixed_abs, tag = 'smem constant byte address 0x4 - core index']
  #allocation1 [shape = 'u32[144,128]{1,0:T(1,128)}', space=vmem, size = 0x12000, scoped, tag = 'internal scratch']
  %s0 = inlined_call_operand.hbm [shape: f32[2,4,16,128], index: 0, kind: input, shape index: {}]
  %s1 = inlined_call_operand.hbm [shape: f32[4,5], index: 1, kind: input, shape index: {}]
  %s2 = inlined_call_operand.hbm [shape: f32[4,5], index: 2, kind: input, shape index: {}]
  %s3 = inlined_call_operand.vmem [shape: f32[4], index: 3, kind: input, shape index: {}]
  %s4 = inlined_call_operand.vmem [shape: f32[4,8], index: 4, kind: input, shape index: {}]
  %s5 = inlined_call_operand.vmem [shape: f32[8], index: 5, kind: input, shape index: {}]
  %s6 = inlined_call_operand.hbm [shape: f32[2,8,16,128], index: 6, kind: output, shape index: {}]
  %s7 = sld [smem:[#allocation0]]
  $region81: #{tpu_custom_call.1} parent=0
    _
  %s9 = ssub.s32 1, %s7
  %s10 = scalar_select 0, %s9, %s7
  $region1: #{tpu_custom_call.1} parent=0
    #allocation2 [shape = 'u8[65536]{0}', space=vmem, size = 0x10000, scoped, tag = 'input window, operand 0']
    #allocation3 [shape = 's32[2]{0}', space=sflag, size = 0x8, scoped, tag = 'scoped memory for tpu_custom_call.1']
    #allocation4 [shape = 's32[2]{0}', space=sflag, size = 0x8, scoped, tag = 'scoped memory for tpu_custom_call.1']
    #allocation5 [shape = 's32[2]{0}', space=sflag, size = 0x8, scoped, tag = 'scoped memory for tpu_custom_call.1']
    #allocation6 [shape = 's32[2]{0}', space=sflag, size = 0x8, scoped, tag = 'scoped memory for tpu_custom_call.1']
    #allocation7 [shape = 'u8[2048]{0}', space=smem, size = 0x800, scoped, tag = 'input window, operand 1, single buffered']
    #allocation8 [shape = 'u8[2048]{0}', space=smem, size = 0x800, scoped, tag = 'input window, operand 2, single buffered']
    #allocation9 [shape = 's32[1]{0}', space=sflag, size = 0x4, scoped, tag = 'scoped memory for tpu_custom_call.1']
    #allocation10 [shape = 'u8[512]{0}', space=smem, size = 0x200, scoped, tag = 'input window, operand 3, single buffered']
    #allocation11 [shape = 'u8[2048]{0}', space=smem, size = 0x800, scoped, tag = 'input window, operand 4, single buffered']
    #allocation12 [shape = 's32[1]{0}', space=sflag, size = 0x4, scoped, tag = 'scoped memory for tpu_custom_call.1']
    #allocation13 [shape = 'u8[512]{0}', space=smem, size = 0x200, scoped, tag = 'input window, operand 5, single buffered']
    #allocation14 [shape = 'u8[131072]{0}', space=vmem, size = 0x20000, scoped, tag = 'output window, operand 0']
    %11 = vsyncpa [#allocation3], 0
    %s12 = scalar_lea.sflag [#allocation3], 1
    %13 = vsyncpa %s12, 0
    %14 = vsyncpa [#allocation5], 0
    %15 = vsyncpa [#allocation9], 0
    %16 = vsyncpa [#allocation6], 0
    %17 = vsyncpa [#allocation12], 0
    %18 = vsyncpa [#allocation4], 0
    %s19 = scalar_lea.sflag [#allocation4], 1
    %20 = vsyncpa %s19, 0
    loop: start=0, step=1, limit=4
    $region2: #{tpu_custom_call.1} parent=1 // loop_pre_header
      _
    $region3: #{tpu_custom_call.1} parent=1 // loop_header
      %s22 = sphi 0, %s26
      %p23 = scmp.ge.s32.totalorder %s22, 4
      %s32 = sphi 0, %s34
      %s35 = sphi 0, %s32
      %s36 = sphi 0, %s35
      %s52 = sphi 0, %s36
      %s56 = sphi 0, %s56
      %s58 = sphi 0, %s56
      %s59 = sphi 0, %s58
      %s73 = sphi 0, %s59
      %s77 = sphi 0, %s77
      %s79 = sphi 0, %s77
      %s80 = sphi 0, %s79
      %s94 = sphi 0, %s80
      %s98 = sphi 0, %s98
      %s100 = sphi 0, %s98
      %s101 = sphi 0, %s100
      %s115 = sphi 0, %s101
      %s119 = sphi 0, %s119
      %s121 = sphi 0, %s119
      %s122 = sphi 0, %s121
      %s136 = sphi 0, %s122
      %s140 = sphi 0, %s140
      %s142 = sphi 0, %s140
      %s143 = sphi 0, %s142
      %s157 = sphi 0, %s143
      %s163 = sphi 0, %s165
      %s166 = sphi 0, %s163
      %s167 = sphi 0, %s166
      %s183 = sphi 0, %s167
    $region4: #{tpu_custom_call.1} parent=1 // loop_header_branch
      %25 = sbr.rel (%p23) target = $region8
    $region5: #{tpu_custom_call.1} parent=1 // loop_body
      %s27 = ssub.s32 %s22, 1
      %s28 = ssub.s32 %s22, 2
      %s29 = sadd.s32 %s22, 1
      %s30 = ssub.s32 %s22, %s29
      %p31 = scmp.eq.s32.totalorder %s30, 0
      %s33 = sadd.s32 %s32, 1
      %s34 = scalar_select %p31, %s32, %s33
      %p37 = pneg %p31
      %p38 = scmp.eq.s32.totalorder %s22, 1
      %p39 = por %p37, %p38
      %p40 = scmp.ne.s32.totalorder %s32, %s35
      %p41 = scmp.eq.s32.totalorder %s22, 0
      %p42 = por %p40, %p41
      %p43 = scmp.ne.s32.totalorder %s32, %s35
      %p44 = scmp.eq.s32.totalorder %s27, 1
      %p45 = por %p43, %p44
      %p46 = scmp.ne.s32.totalorder %s35, %s36
      %p47 = scmp.eq.s32.totalorder %s27, 0
      %p48 = por %p46, %p47
      %p49 = scmp.ne.s32.totalorder %s35, %s36
      %p50 = scmp.eq.s32.totalorder %s28, 1
      %p51 = por %p49, %p50
      %p53 = scmp.ne.s32.totalorder %s36, %s52
      %p54 = scmp.eq.s32.totalorder %s28, 0
      %p55 = por %p53, %p54
      %s57 = sadd.s32 %s56, 1
      %p60 = scmp.eq.s32.totalorder %s22, 1
      %p61 = scmp.ne.s32.totalorder %s56, %s58
      %p62 = scmp.eq.s32.totalorder %s22, 0
      %p63 = por %p61, %p62
      %p64 = scmp.ne.s32.totalorder %s56, %s58
      %p65 = scmp.eq.s32.totalorder %s27, 1
      %p66 = por %p64, %p65
      %p67 = scmp.ne.s32.totalorder %s58, %s59
      %p68 = scmp.eq.s32.totalorder %s27, 0
      %p69 = por %p67, %p68
      %p70 = scmp.ne.s32.totalorder %s58, %s59
      %p71 = scmp.eq.s32.totalorder %s28, 1
      %p72 = por %p70, %p71
      %p74 = scmp.ne.s32.totalorder %s59, %s73
      %p75 = scmp.eq.s32.totalorder %s28, 0
      %p76 = por %p74, %p75
      %s78 = sadd.s32 %s77, 1
      %p81 = scmp.eq.s32.totalorder %s22, 1
      %p82 = scmp.ne.s32.totalorder %s77, %s79
      %p83 = scmp.eq.s32.totalorder %s22, 0
      %p84 = por %p82, %p83
      %p85 = scmp.ne.s32.totalorder %s77, %s79
      %p86 = scmp.eq.s32.totalorder %s27, 1
      %p87 = por %p85, %p86
      %p88 = scmp.ne.s32.totalorder %s79, %s80
      %p89 = scmp.eq.s32.totalorder %s27, 0
      %p90 = por %p88, %p89
      %p91 = scmp.ne.s32.totalorder %s79, %s80
      %p92 = scmp.eq.s32.totalorder %s28, 1
      %p93 = por %p91, %p92
      %p95 = scmp.ne.s32.totalorder %s80, %s94
      %p96 = scmp.eq.s32.totalorder %s28, 0
      %p97 = por %p95, %p96
      %s99 = sadd.s32 %s98, 1
      %p102 = scmp.eq.s32.totalorder %s22, 1
      %p103 = scmp.ne.s32.totalorder %s98, %s100
      %p104 = scmp.eq.s32.totalorder %s22, 0
      %p105 = por %p103, %p104
      %p106 = scmp.ne.s32.totalorder %s98, %s100
      %p107 = scmp.eq.s32.totalorder %s27, 1
      %p108 = por %p106, %p107
      %p109 = scmp.ne.s32.totalorder %s100, %s101
      %p110 = scmp.eq.s32.totalorder %s27, 0
      %p111 = por %p109, %p110
      %p112 = scmp.ne.s32.totalorder %s100, %s101
      %p113 = scmp.eq.s32.totalorder %s28, 1
      %p114 = por %p112, %p113
      %p116 = scmp.ne.s32.totalorder %s101, %s115
      %p117 = scmp.eq.s32.totalorder %s28, 0
      %p118 = por %p116, %p117
      %s120 = sadd.s32 %s119, 1
      %p123 = scmp.eq.s32.totalorder %s22, 1
      %p124 = scmp.ne.s32.totalorder %s119, %s121
      %p125 = scmp.eq.s32.totalorder %s22, 0
      %p126 = por %p124, %p125
      %p127 = scmp.ne.s32.totalorder %s119, %s121
      %p128 = scmp.eq.s32.totalorder %s27, 1
      %p129 = por %p127, %p128
      %p130 = scmp.ne.s32.totalorder %s121, %s122
      %p131 = scmp.eq.s32.totalorder %s27, 0
      %p132 = por %p130, %p131
      %p133 = scmp.ne.s32.totalorder %s121, %s122
      %p134 = scmp.eq.s32.totalorder %s28, 1
      %p135 = por %p133, %p134
      %p137 = scmp.ne.s32.totalorder %s122, %s136
      %p138 = scmp.eq.s32.totalorder %s28, 0
      %p139 = por %p137, %p138
      %s141 = sadd.s32 %s140, 1
      %p144 = scmp.eq.s32.totalorder %s22, 1
      %p145 = scmp.ne.s32.totalorder %s140, %s142
      %p146 = scmp.eq.s32.totalorder %s22, 0
      %p147 = por %p145, %p146
      %p148 = scmp.ne.s32.totalorder %s140, %s142
      %p149 = scmp.eq.s32.totalorder %s27, 1
      %p150 = por %p148, %p149
      %p151 = scmp.ne.s32.totalorder %s142, %s143
      %p152 = scmp.eq.s32.totalorder %s27, 0
      %p153 = por %p151, %p152
      %p154 = scmp.ne.s32.totalorder %s142, %s143
      %p155 = scmp.eq.s32.totalorder %s28, 1
      %p156 = por %p154, %p155
      %p158 = scmp.ne.s32.totalorder %s143, %s157
      %p159 = scmp.eq.s32.totalorder %s28, 0
      %p160 = por %p158, %p159
      %s161 = ssub.s32 %s22, %s29
      %p162 = scmp.eq.s32.totalorder %s161, 0
      %s164 = sadd.s32 %s163, 1
      %s165 = scalar_select %p162, %s163, %s164
      %p168 = pneg %p162
      %p169 = scmp.eq.s32.totalorder %s22, 1
      %p170 = por %p168, %p169
      %p171 = scmp.ne.s32.totalorder %s163, %s166
      %p172 = scmp.eq.s32.totalorder %s22, 0
      %p173 = por %p171, %p172
      %p174 = scmp.ne.s32.totalorder %s163, %s166
      %p175 = scmp.eq.s32.totalorder %s27, 1
      %p176 = por %p174, %p175
      %p177 = scmp.ne.s32.totalorder %s166, %s167
      %p178 = scmp.eq.s32.totalorder %s27, 0
      %p179 = por %p177, %p178
      %p180 = scmp.ne.s32.totalorder %s166, %s167
      %p181 = scmp.eq.s32.totalorder %s28, 1
      %p182 = por %p180, %p181
      %p184 = scmp.ne.s32.totalorder %s167, %s183
      %p185 = scmp.eq.s32.totalorder %s28, 0
      %p186 = por %p184, %p185
      %p187 = scmp.le.s32.totalorder 1, %s22
      %p188 = scmp.lt.s32.totalorder %s22, 3
      %p189 = pnand %p187, %p188
      %p190 = pneg %p189
      // Predicated region
      $region9: #{tpu_custom_call.1} parent=5 // pred_check
        _
      $region10: #{tpu_custom_call.1} parent=5 // pred_check_branch
        %192 = sbr.rel (%p189) target = $region12
      $region11: #{tpu_custom_call.1} parent=5 // pred_region
        %s193 = ssub.s32 %s22, 1
        // Predicated region
        $region13: #{tpu_custom_call.1} parent=11 // pred_check
          %p194 = pneg %p69
        $region14: #{tpu_custom_call.1} parent=11 // pred_check_branch
          %196 = sbr.rel (%p194) target = $region16
        $region15: #{tpu_custom_call.1} parent=11 // pred_region
          %s198 = ssub.s32 64, 64
          %199 = vsyncadd [#allocation5], %s198
          %202 = dma.hbm_to_smem %s1, 64, [#allocation7], [#allocation5]
        $region16: #{tpu_custom_call.1} parent=11 // pred_fallthru
          _
        // Predicated region
        $region17: #{tpu_custom_call.1} parent=11 // pred_check
          %p203 = pneg %p90
        $region18: #{tpu_custom_call.1} parent=11 // pred_check_branch
          %205 = sbr.rel (%p203) target = $region20
        $region19: #{tpu_custom_call.1} parent=11 // pred_region
          %s207 = ssub.s32 64, 64
          %208 = vsyncadd [#allocation9], %s207
          %211 = dma.hbm_to_smem %s2, 64, [#allocation8], [#allocation9]
        $region20: #{tpu_custom_call.1} parent=11 // pred_fallthru
          _
        // Predicated region
        $region21: #{tpu_custom_call.1} parent=11 // pred_check
          %p212 = pneg %p111
        $region22: #{tpu_custom_call.1} parent=11 // pred_check_branch
          %214 = sbr.rel (%p212) target = $region24
        $region23: #{tpu_custom_call.1} parent=11 // pred_region
          %s216 = ssub.s32 16, 16
          %217 = vsyncadd [#allocation6], %s216
          %s219 = sshll.u32 %s3, 4
          %s220 = int_to_ptr.vmem [resolvable:$true] %s219
          %222 = dma.vmem_to_smem %s220, 16, [#allocation10], [#allocation6]
        $region24: #{tpu_custom_call.1} parent=11 // pred_fallthru
          _
        // Predicated region
        $region25: #{tpu_custom_call.1} parent=11 // pred_check
          %p223 = pneg %p132
        $region26: #{tpu_custom_call.1} parent=11 // pred_check_branch
          %225 = sbr.rel (%p223) target = $region28
        $region27: #{tpu_custom_call.1} parent=11 // pred_region
          %s227 = ssub.s32 64, 64
          %228 = vsyncadd [#allocation12], %s227
          %s230 = sshll.u32 %s4, 4
          %s231 = int_to_ptr.vmem [resolvable:$true] %s230
          %233 = dma.vmem_to_smem %s231, 64, [#allocation11], [#allocation12]
        $region28: #{tpu_custom_call.1} parent=11 // pred_fallthru
          _
        // Predicated region
        $region29: #{tpu_custom_call.1} parent=11 // pred_check
          %p234 = pneg %p153
        $region30: #{tpu_custom_call.1} parent=11 // pred_check_branch
          %236 = sbr.rel (%p234) target = $region32
        $region31: #{tpu_custom_call.1} parent=11 // pred_region
          %s238 = ssub.s32 16, 16
          %239 = vsyncadd [#allocation12], %s238
          %s241 = sshll.u32 %s5, 4
          %s242 = int_to_ptr.vmem [resolvable:$true] %s241
          %244 = dma.vmem_to_smem %s242, 16, [#allocation13], [#allocation12]
        $region32: #{tpu_custom_call.1} parent=11 // pred_fallthru
          _
      $region12: #{tpu_custom_call.1} parent=5 // pred_fallthru
        _
      %p245 = scmp.lt.s32.totalorder %s22, 2
      // Predicated region
      $region33: #{tpu_custom_call.1} parent=5 // pred_check
        %p246 = pneg %p245
      $region34: #{tpu_custom_call.1} parent=5 // pred_check_branch
        %248 = sbr.rel (%p246) target = $region36
      $region35: #{tpu_custom_call.1} parent=5 // pred_region
        // Predicated region
        $region37: #{tpu_custom_call.1} parent=35 // pred_check
          %p249 = pneg %p42
        $region38: #{tpu_custom_call.1} parent=35 // pred_check_branch
          %251 = sbr.rel (%p249) target = $region40
        $region39: #{tpu_custom_call.1} parent=35 // pred_region
          %s252 = sand.u32 %s32, 1
          %s253 = scalar_lea.sflag [#allocation3], %s252
          %s254 = sand.u32 %s32, 1
          %s255 = smul.addr %s254, 64
          %s256 = scalar_lea.vmem [#allocation2], %s255
          %s258 = ssub.s32 1024, 1024
          %259 = vsyncadd %s253, %s258
          %s260 = smul.addr %s22, 8
          %s261 = smul.addr %s260, 128
          %s262 = scalar_lea.hbm %s0, %s261
          %s263 = sshll.u32 %s256, 4
          %s264 = int_to_ptr.vmem [resolvable:$true] %s263
          %269 = dma.hbm_to_vmem [thread:$0]  %s262, 1024, %s264, %s253, 128, 128, 8
        $region40: #{tpu_custom_call.1} parent=35 // pred_fallthru
          _
      $region36: #{tpu_custom_call.1} parent=5 // pred_fallthru
        _
      %p270 = scmp.le.s32.totalorder 1, %s22
      %p271 = scmp.lt.s32.totalorder %s22, 3
      %p272 = pnand %p270, %p271
      %p273 = pneg %p272
      // Predicated region
      $region41: #{tpu_custom_call.1} parent=5 // pred_check
        _
      $region42: #{tpu_custom_call.1} parent=5 // pred_check_branch
        %275 = sbr.rel (%p272) target = $region44
      $region43: #{tpu_custom_call.1} parent=5 // pred_region
        %s276 = ssub.s32 %s22, 1
        %s277 = sand.u32 %s35, 1
        %s278 = scalar_lea.sflag [#allocation3], %s277
        %s279 = sand.u32 %s35, 1
        %s280 = smul.addr %s279, 64
        %s281 = scalar_lea.vmem [#allocation2], %s280
        // Predicated region
        $region45: #{tpu_custom_call.1} parent=43 // pred_check
          %p282 = pneg %p48
        $region46: #{tpu_custom_call.1} parent=43 // pred_check_branch
          %284 = sbr.rel (%p282) target = $region48
        $region47: #{tpu_custom_call.1} parent=43 // pred_region
          %285 = dma.done %s278, 1024
        $region48: #{tpu_custom_call.1} parent=43 // pred_fallthru
          _
        // Predicated region
        $region49: #{tpu_custom_call.1} parent=43 // pred_check
          %p286 = pneg %p69
        $region50: #{tpu_custom_call.1} parent=43 // pred_check_branch
          %288 = sbr.rel (%p286) target = $region52
        $region51: #{tpu_custom_call.1} parent=43 // pred_region
          %289 = dma.done [#allocation5], 64
        $region52: #{tpu_custom_call.1} parent=43 // pred_fallthru
          _
        // Predicated region
        $region53: #{tpu_custom_call.1} parent=43 // pred_check
          %p290 = pneg %p90
        $region54: #{tpu_custom_call.1} parent=43 // pred_check_branch
          %292 = sbr.rel (%p290) target = $region56
        $region55: #{tpu_custom_call.1} parent=43 // pred_region
          %293 = dma.done [#allocation9], 64
        $region56: #{tpu_custom_call.1} parent=43 // pred_fallthru
          _
        // Predicated region
        $region57: #{tpu_custom_call.1} parent=43 // pred_check
          %p294 = pneg %p111
        $region58: #{tpu_custom_call.1} parent=43 // pred_check_branch
          %296 = sbr.rel (%p294) target = $region60
        $region59: #{tpu_custom_call.1} parent=43 // pred_region
          %297 = dma.done [#allocation6], 16
        $region60: #{tpu_custom_call.1} parent=43 // pred_fallthru
          _
        // Predicated region
        $region61: #{tpu_custom_call.1} parent=43 // pred_check
          %p298 = pneg %p132
        $region62: #{tpu_custom_call.1} parent=43 // pred_check_branch
          %300 = sbr.rel (%p298) target = $region64
        $region63: #{tpu_custom_call.1} parent=43 // pred_region
          %301 = dma.done [#allocation12], 64
        $region64: #{tpu_custom_call.1} parent=43 // pred_fallthru
          _
        // Predicated region
        $region65: #{tpu_custom_call.1} parent=43 // pred_check
          %p302 = pneg %p153
        $region66: #{tpu_custom_call.1} parent=43 // pred_check_branch
          %304 = sbr.rel (%p302) target = $region68
        $region67: #{tpu_custom_call.1} parent=43 // pred_region
          %305 = dma.done [#allocation12], 16
        $region68: #{tpu_custom_call.1} parent=43 // pred_fallthru
          _
        %306 = sfence
        %s307 = sand.u32 %s35, 1
        %s308 = scalar_lea.sflag [#allocation3], %s307
        %s309 = sand.u32 %s35, 1
        %s310 = smul.addr %s309, 64
        %s311 = scalar_lea.vmem [#allocation2], %s310
        %p312 = pneg %p48
        %p313 = pneg %p45
        %p314 = pneg %p69
        %p315 = pneg %p66
        %p316 = pneg %p90
        %p317 = pneg %p87
        %p318 = pneg %p111
        %p319 = pneg %p108
        %p320 = pneg %p132
        %p321 = pneg %p129
        %p322 = pneg %p153
        %p323 = pneg %p150
        %p324 = pneg %p179
        %p325 = pneg %p176
        %s326 = sand.u32 %s166, 1
        %s327 = scalar_lea.sflag [#allocation4], %s326
        %s328 = sand.u32 %s166, 1
        %s329 = smul.addr %s328, 128
        %s330 = scalar_lea.vmem [#allocation14], %s329
        %v331 = vlaneseq
        %v332 = vand.u32 %v331, 127
        %v333 = vlaneseq
        %v334 = vshrl.u32 %v333, 7
        %v335 = vadd.s32 %v334, 8
        %v336 = vadd.s32 %v332, 4294967294
        %vm337 = vcmp.ge.s32.totalorder %v336, 0
        %vm338 = vcmp.lt.s32.totalorder %v336, 128
        %vm339 = vmand %vm337, %vm338
        %v340 = vadd.s32 %v334, 4294967294
        %v341 = vadd.s32 %v335, 4294967294
        %vm342 = vcmp.ge.s32.totalorder %v340, 0
        %vm343 = vcmp.ge.s32.totalorder %v341, 0
        %vm344 = vcmp.lt.s32.totalorder %v340, 16
        %vm345 = vcmp.lt.s32.totalorder %v341, 16
        %vm346 = vmand %vm342, %vm344
        %vm347 = vmand %vm343, %vm345
        %v348 = vadd.s32 %v332, 4294967295
        %vm349 = vcmp.ge.s32.totalorder %v348, 0
        %vm350 = vcmp.lt.s32.totalorder %v348, 128
        %vm351 = vmand %vm349, %vm350
        %v352 = vadd.s32 %v334, 4294967295
        %v353 = vadd.s32 %v335, 4294967295
        %vm354 = vcmp.ge.s32.totalorder %v352, 0
        %vm355 = vcmp.ge.s32.totalorder %v353, 0
        %vm356 = vcmp.lt.s32.totalorder %v352, 16
        %vm357 = vcmp.lt.s32.totalorder %v353, 16
        %vm358 = vmand %vm354, %vm356
        %vm359 = vmand %vm355, %vm357
        %v360 = vadd.s32 %v332, 1
        %vm361 = vcmp.ge.s32.totalorder %v360, 0
        %vm362 = vcmp.lt.s32.totalorder %v360, 128
        %vm363 = vmand %vm361, %vm362
        %v364 = vadd.s32 %v334, 1
        %v365 = vadd.s32 %v335, 1
        %vm366 = vcmp.ge.s32.totalorder %v364, 0
        %vm367 = vcmp.ge.s32.totalorder %v365, 0
        %vm368 = vcmp.lt.s32.totalorder %v364, 16
        %vm369 = vcmp.lt.s32.totalorder %v365, 16
        %vm370 = vmand %vm366, %vm368
        %vm371 = vmand %vm367, %vm369
        %v372 = vadd.s32 %v332, 2
        %vm373 = vcmp.ge.s32.totalorder %v372, 0
        %vm374 = vcmp.lt.s32.totalorder %v372, 128
        %vm375 = vmand %vm373, %vm374
        %v376 = vadd.s32 %v334, 2
        %v377 = vadd.s32 %v335, 2
        %vm378 = vcmp.ge.s32.totalorder %v376, 0
        %vm379 = vcmp.ge.s32.totalorder %v377, 0
        %vm380 = vcmp.lt.s32.totalorder %v376, 16
        %vm381 = vcmp.lt.s32.totalorder %v377, 16
        %vm382 = vmand %vm378, %vm380
        %vm383 = vmand %vm379, %vm381
        %v384 = vld [vmem:[%s281] sm:$0xff]
        %v385 = vld [vmem:[%s281 + $0x8] sm:$0xff]
        %s386 = sld [smem:[#allocation10]]
        %v387 = vstv %s386
        %v388 = vadd.f32 %v384, %v387
        %v389 = vadd.f32 %v385, %v387
        %390 = vrot.lane.b32.xlu0 %v384, 2
        %v391 = vpop.permute.xlu0 %390
        %392 = vrot.lane.b32.xlu0 %v385, 2
        %v393 = vpop.permute.xlu0 %392
        %v394 = vsel %vm339, %v391, 0.0
        %v395 = vsel %vm339, %v393, 0.0
        %s396 = sld [smem:[#allocation7]]
        %v397 = vstv %s396
        %v398 = vmul.f32 %v394, %v397
        %v399 = vmul.f32 %v395, %v397
        %v400 = vadd.f32 %v388, %v398
        %v401 = vadd.f32 %v389, %v399
        %v402 = vrot.slane %v384, 6
        %v403 = vrot.slane %v385, 6
        %vm404 = vcmp.lt.s32.totalorder %v334, 2
        %v405 = vsel %vm404, %v402, %v403
        %v406 = vsel %vm404, %v403, %v402
        %v407 = vsel %vm346, %v406, 0.0
        %v408 = vsel %vm347, %v405, 0.0
        %s409 = sld [smem:[#allocation8]]
        %v410 = vstv %s409
        %v411 = vmul.f32 %v407, %v410
        %v412 = vmul.f32 %v408, %v410
        %v413 = vadd.f32 %v400, %v411
        %v414 = vadd.f32 %v401, %v412
        %415 = vrot.lane.b32.xlu0 %v384, 1
        %v416 = vpop.permute.xlu0 %415
        %417 = vrot.lane.b32.xlu0 %v385, 1
        %v418 = vpop.permute.xlu0 %417
        %v419 = vsel %vm351, %v416, 0.0
        %v420 = vsel %vm351, %v418, 0.0
        %s421 = sld [smem:[#allocation7 + $0x1]]
        %v422 = vstv %s421
        %v423 = vmul.f32 %v419, %v422
        %v424 = vmul.f32 %v420, %v422
        %v425 = vadd.f32 %v413, %v423
        %v426 = vadd.f32 %v414, %v424
        %v427 = vrot.slane %v384, 7
        %v428 = vrot.slane %v385, 7
        %vm429 = vcmp.lt.s32.totalorder %v334, 1
        %v430 = vsel %vm429, %v427, %v428
        %v431 = vsel %vm429, %v428, %v427
        %v432 = vsel %vm358, %v431, 0.0
        %v433 = vsel %vm359, %v430, 0.0
        %s434 = sld [smem:[#allocation8 + $0x1]]
        %v435 = vstv %s434
        %v436 = vmul.f32 %v432, %v435
        %v437 = vmul.f32 %v433, %v435
        %v438 = vadd.f32 %v425, %v436
        %v439 = vadd.f32 %v426, %v437
        %s440 = sld [smem:[#allocation7 + $0x2]]
        %s441 = sld [smem:[#allocation8 + $0x2]]
        %s442 = sadd.f32 %s440, %s441
        %v443 = vstv %s442
        %v444 = vmul.f32 %v384, %v443
        %v445 = vmul.f32 %v385, %v443
        %v446 = vadd.f32 %v438, %v444
        %v447 = vadd.f32 %v439, %v445
        %448 = vrot.lane.b32.xlu0 %v384, 127
        %v449 = vpop.permute.xlu0 %448
        %450 = vrot.lane.b32.xlu0 %v385, 127
        %v451 = vpop.permute.xlu0 %450
        %v452 = vsel %vm363, %v449, 0.0
        %v453 = vsel %vm363, %v451, 0.0
        %s454 = sld [smem:[#allocation7 + $0x3]]
        %v455 = vstv %s454
        %v456 = vmul.f32 %v452, %v455
        %v457 = vmul.f32 %v453, %v455
        %v458 = vadd.f32 %v446, %v456
        %v459 = vadd.f32 %v447, %v457
        %v460 = vrot.slane %v384, 1
        %v461 = vrot.slane %v385, 1
        %vm462 = vcmp.lt.s32.totalorder %v334, 7
        %v463 = vsel %vm462, %v460, %v461
        %v464 = vsel %vm462, %v461, %v460
        %v465 = vsel %vm370, %v463, 0.0
        %v466 = vsel %vm371, %v464, 0.0
        %s467 = sld [smem:[#allocation8 + $0x3]]
        %v468 = vstv %s467
        %v469 = vmul.f32 %v465, %v468
        %v470 = vmul.f32 %v466, %v468
        %v471 = vadd.f32 %v458, %v469
        %v472 = vadd.f32 %v459, %v470
        %473 = vrot.lane.b32.xlu0 %v384, 126
        %v474 = vpop.permute.xlu0 %473
        %475 = vrot.lane.b32.xlu0 %v385, 126
        %v476 = vpop.permute.xlu0 %475
        %v477 = vsel %vm375, %v474, 0.0
        %v478 = vsel %vm375, %v476, 0.0
        %s479 = sld [smem:[#allocation7 + $0x4]]
        %v480 = vstv %s479
        %v481 = vmul.f32 %v477, %v480
        %v482 = vmul.f32 %v478, %v480
        %v483 = vadd.f32 %v471, %v481
        %v484 = vadd.f32 %v472, %v482
        %v485 = vrot.slane %v384, 2
        %v486 = vrot.slane %v385, 2
        %vm487 = vcmp.lt.s32.totalorder %v334, 6
        %v488 = vsel %vm487, %v485, %v486
        %v489 = vsel %vm487, %v486, %v485
        %v490 = vsel %vm382, %v488, 0.0
        %v491 = vsel %vm383, %v489, 0.0
        %s492 = sld [smem:[#allocation8 + $0x4]]
        %v493 = vstv %s492
        %v494 = vmul.f32 %v490, %v493
        %v495 = vmul.f32 %v491, %v493
        %v496 = vadd.f32 %v483, %v494
        %v497 = vadd.f32 %v484, %v495
        %v498 = vmax.f32 %v496, 0.0
        %v499 = vmax.f32 %v497, 0.0
        %s500 = scalar_lea.vmem %s281, 16 [#allocation2]
        %v501 = vld [vmem:[%s500] sm:$0xff]
        %v502 = vld [vmem:[%s500 + $0x8] sm:$0xff]
        %s503 = sld [smem:[#allocation10 + $0x1]]
        %v504 = vstv %s503
        %v505 = vadd.f32 %v501, %v504
        %v506 = vadd.f32 %v502, %v504
        %507 = vrot.lane.b32.xlu0 %v501, 2
        %v508 = vpop.permute.xlu0 %507
        %509 = vrot.lane.b32.xlu0 %v502, 2
        %v510 = vpop.permute.xlu0 %509
        %v511 = vsel %vm339, %v508, 0.0
        %v512 = vsel %vm339, %v510, 0.0
        %s513 = sld [smem:[#allocation7 + $0x80]]
        %v514 = vstv %s513
        %v515 = vmul.f32 %v511, %v514
        %v516 = vmul.f32 %v512, %v514
        %v517 = vadd.f32 %v505, %v515
        %v518 = vadd.f32 %v506, %v516
        %v519 = vrot.slane %v501, 6
        %v520 = vrot.slane %v502, 6
        %v521 = vsel %vm404, %v519, %v520
        %v522 = vsel %vm404, %v520, %v519
        %v523 = vsel %vm346, %v522, 0.0
        %v524 = vsel %vm347, %v521, 0.0
        %s525 = sld [smem:[#allocation8 + $0x80]]
        %v526 = vstv %s525
        %v527 = vmul.f32 %v523, %v526
        %v528 = vmul.f32 %v524, %v526
        %v529 = vadd.f32 %v517, %v527
        %v530 = vadd.f32 %v518, %v528
        %531 = vrot.lane.b32.xlu0 %v501, 1
        %v532 = vpop.permute.xlu0 %531
        %533 = vrot.lane.b32.xlu0 %v502, 1
        %v534 = vpop.permute.xlu0 %533
        %v535 = vsel %vm351, %v532, 0.0
        %v536 = vsel %vm351, %v534, 0.0
        %s537 = sld [smem:[#allocation7 + $0x81]]
        %v538 = vstv %s537
        %v539 = vmul.f32 %v535, %v538
        %v540 = vmul.f32 %v536, %v538
        %v541 = vadd.f32 %v529, %v539
        %v542 = vadd.f32 %v530, %v540
        %v543 = vrot.slane %v501, 7
        %v544 = vrot.slane %v502, 7
        %v545 = vsel %vm429, %v543, %v544
        %v546 = vsel %vm429, %v544, %v543
        %v547 = vsel %vm358, %v546, 0.0
        %v548 = vsel %vm359, %v545, 0.0
        %s549 = sld [smem:[#allocation8 + $0x81]]
        %v550 = vstv %s549
        %v551 = vmul.f32 %v547, %v550
        %v552 = vmul.f32 %v548, %v550
        %v553 = vadd.f32 %v541, %v551
        %v554 = vadd.f32 %v542, %v552
        %s555 = sld [smem:[#allocation7 + $0x82]]
        %s556 = sld [smem:[#allocation8 + $0x82]]
        %s557 = sadd.f32 %s555, %s556
        %v558 = vstv %s557
        %v559 = vmul.f32 %v501, %v558
        %v560 = vmul.f32 %v502, %v558
        %v561 = vadd.f32 %v553, %v559
        %v562 = vadd.f32 %v554, %v560
        %563 = vrot.lane.b32.xlu0 %v501, 127
        %v564 = vpop.permute.xlu0 %563
        %565 = vrot.lane.b32.xlu0 %v502, 127
        %v566 = vpop.permute.xlu0 %565
        %v567 = vsel %vm363, %v564, 0.0
        %v568 = vsel %vm363, %v566, 0.0
        %s569 = sld [smem:[#allocation7 + $0x83]]
        %v570 = vstv %s569
        %v571 = vmul.f32 %v567, %v570
        %v572 = vmul.f32 %v568, %v570
        %v573 = vadd.f32 %v561, %v571
        %v574 = vadd.f32 %v562, %v572
        %v575 = vrot.slane %v501, 1
        %v576 = vrot.slane %v502, 1
        %v577 = vsel %vm462, %v575, %v576
        %v578 = vsel %vm462, %v576, %v575
        %v579 = vsel %vm370, %v577, 0.0
        %v580 = vsel %vm371, %v578, 0.0
        %s581 = sld [smem:[#allocation8 + $0x83]]
        %v582 = vstv %s581
        %v583 = vmul.f32 %v579, %v582
        %v584 = vmul.f32 %v580, %v582
        %v585 = vadd.f32 %v573, %v583
        %v586 = vadd.f32 %v574, %v584
        %587 = vrot.lane.b32.xlu0 %v501, 126
        %v588 = vpop.permute.xlu0 %587
        %589 = vrot.lane.b32.xlu0 %v502, 126
        %v590 = vpop.permute.xlu0 %589
        %v591 = vsel %vm375, %v588, 0.0
        %v592 = vsel %vm375, %v590, 0.0
        %s593 = sld [smem:[#allocation7 + $0x84]]
        %v594 = vstv %s593
        %v595 = vmul.f32 %v591, %v594
        %v596 = vmul.f32 %v592, %v594
        %v597 = vadd.f32 %v585, %v595
        %v598 = vadd.f32 %v586, %v596
        %v599 = vrot.slane %v501, 2
        %v600 = vrot.slane %v502, 2
        %v601 = vsel %vm487, %v599, %v600
        %v602 = vsel %vm487, %v600, %v599
        %v603 = vsel %vm382, %v601, 0.0
        %v604 = vsel %vm383, %v602, 0.0
        %s605 = sld [smem:[#allocation8 + $0x84]]
        %v606 = vstv %s605
        %v607 = vmul.f32 %v603, %v606
        %v608 = vmul.f32 %v604, %v606
        %v609 = vadd.f32 %v597, %v607
        %v610 = vadd.f32 %v598, %v608
        %v611 = vmax.f32 %v609, 0.0
        %v612 = vmax.f32 %v610, 0.0
        %s613 = scalar_lea.vmem %s281, 32 [#allocation2]
        %v614 = vld [vmem:[%s613] sm:$0xff]
        %v615 = vld [vmem:[%s613 + $0x8] sm:$0xff]
        %s616 = sld [smem:[#allocation10 + $0x2]]
        %v617 = vstv %s616
        %v618 = vadd.f32 %v614, %v617
        %v619 = vadd.f32 %v615, %v617
        %620 = vrot.lane.b32.xlu0 %v614, 2
        %v621 = vpop.permute.xlu0 %620
        %622 = vrot.lane.b32.xlu0 %v615, 2
        %v623 = vpop.permute.xlu0 %622
        %v624 = vsel %vm339, %v621, 0.0
        %v625 = vsel %vm339, %v623, 0.0
        %s626 = sld [smem:[#allocation7 + $0x100]]
        %v627 = vstv %s626
        %v628 = vmul.f32 %v624, %v627
        %v629 = vmul.f32 %v625, %v627
        %v630 = vadd.f32 %v618, %v628
        %v631 = vadd.f32 %v619, %v629
        %v632 = vrot.slane %v614, 6
        %v633 = vrot.slane %v615, 6
        %v634 = vsel %vm404, %v632, %v633
        %v635 = vsel %vm404, %v633, %v632
        %v636 = vsel %vm346, %v635, 0.0
        %v637 = vsel %vm347, %v634, 0.0
        %s638 = sld [smem:[#allocation8 + $0x100]]
        %v639 = vstv %s638
        %v640 = vmul.f32 %v636, %v639
        %v641 = vmul.f32 %v637, %v639
        %v642 = vadd.f32 %v630, %v640
        %v643 = vadd.f32 %v631, %v641
        %644 = vrot.lane.b32.xlu0 %v614, 1
        %v645 = vpop.permute.xlu0 %644
        %646 = vrot.lane.b32.xlu0 %v615, 1
        %v647 = vpop.permute.xlu0 %646
        %v648 = vsel %vm351, %v645, 0.0
        %v649 = vsel %vm351, %v647, 0.0
        %s650 = sld [smem:[#allocation7 + $0x101]]
        %v651 = vstv %s650
        %v652 = vmul.f32 %v648, %v651
        %v653 = vmul.f32 %v649, %v651
        %v654 = vadd.f32 %v642, %v652
        %v655 = vadd.f32 %v643, %v653
        %v656 = vrot.slane %v614, 7
        %v657 = vrot.slane %v615, 7
        %v658 = vsel %vm429, %v656, %v657
        %v659 = vsel %vm429, %v657, %v656
        %v660 = vsel %vm358, %v659, 0.0
        %v661 = vsel %vm359, %v658, 0.0
        %s662 = sld [smem:[#allocation8 + $0x101]]
        %v663 = vstv %s662
        %v664 = vmul.f32 %v660, %v663
        %v665 = vmul.f32 %v661, %v663
        %v666 = vadd.f32 %v654, %v664
        %v667 = vadd.f32 %v655, %v665
        %s668 = sld [smem:[#allocation7 + $0x102]]
        %s669 = sld [smem:[#allocation8 + $0x102]]
        %s670 = sadd.f32 %s668, %s669
        %v671 = vstv %s670
        %v672 = vmul.f32 %v614, %v671
        %v673 = vmul.f32 %v615, %v671
        %v674 = vadd.f32 %v666, %v672
        %v675 = vadd.f32 %v667, %v673
        %676 = vrot.lane.b32.xlu0 %v614, 127
        %v677 = vpop.permute.xlu0 %676
        %678 = vrot.lane.b32.xlu0 %v615, 127
        %v679 = vpop.permute.xlu0 %678
        %v680 = vsel %vm363, %v677, 0.0
        %v681 = vsel %vm363, %v679, 0.0
        %s682 = sld [smem:[#allocation7 + $0x103]]
        %v683 = vstv %s682
        %v684 = vmul.f32 %v680, %v683
        %v685 = vmul.f32 %v681, %v683
        %v686 = vadd.f32 %v674, %v684
        %v687 = vadd.f32 %v675, %v685
        %v688 = vrot.slane %v614, 1
        %v689 = vrot.slane %v615, 1
        %v690 = vsel %vm462, %v688, %v689
        %v691 = vsel %vm462, %v689, %v688
        %v692 = vsel %vm370, %v690, 0.0
        %v693 = vsel %vm371, %v691, 0.0
        %s694 = sld [smem:[#allocation8 + $0x103]]
        %v695 = vstv %s694
        %v696 = vmul.f32 %v692, %v695
        %v697 = vmul.f32 %v693, %v695
        %v698 = vadd.f32 %v686, %v696
        %v699 = vadd.f32 %v687, %v697
        %700 = vrot.lane.b32.xlu0 %v614, 126
        %v701 = vpop.permute.xlu0 %700
        %702 = vrot.lane.b32.xlu0 %v615, 126
        %v703 = vpop.permute.xlu0 %702
        %v704 = vsel %vm375, %v701, 0.0
        %v705 = vsel %vm375, %v703, 0.0
        %s706 = sld [smem:[#allocation7 + $0x104]]
        %v707 = vstv %s706
        %v708 = vmul.f32 %v704, %v707
        %v709 = vmul.f32 %v705, %v707
        %v710 = vadd.f32 %v698, %v708
        %v711 = vadd.f32 %v699, %v709
        %v712 = vrot.slane %v614, 2
        %v713 = vrot.slane %v615, 2
        %v714 = vsel %vm487, %v712, %v713
        %v715 = vsel %vm487, %v713, %v712
        %v716 = vsel %vm382, %v714, 0.0
        %v717 = vsel %vm383, %v715, 0.0
        %s718 = sld [smem:[#allocation8 + $0x104]]
        %v719 = vstv %s718
        %v720 = vmul.f32 %v716, %v719
        %v721 = vmul.f32 %v717, %v719
        %v722 = vadd.f32 %v710, %v720
        %v723 = vadd.f32 %v711, %v721
        %v724 = vmax.f32 %v722, 0.0
        %v725 = vmax.f32 %v723, 0.0
        %s726 = scalar_lea.vmem %s281, 48 [#allocation2]
        %v727 = vld [vmem:[%s726] sm:$0xff]
        %v728 = vld [vmem:[%s726 + $0x8] sm:$0xff]
        %s729 = sld [smem:[#allocation10 + $0x3]]
        %v730 = vstv %s729
        %v731 = vadd.f32 %v727, %v730
        %v732 = vadd.f32 %v728, %v730
        %733 = vrot.lane.b32.xlu0 %v727, 2
        %v734 = vpop.permute.xlu0 %733
        %735 = vrot.lane.b32.xlu0 %v728, 2
        %v736 = vpop.permute.xlu0 %735
        %v737 = vsel %vm339, %v734, 0.0
        %v738 = vsel %vm339, %v736, 0.0
        %s739 = sld [smem:[#allocation7 + $0x180]]
        %v740 = vstv %s739
        %v741 = vmul.f32 %v737, %v740
        %v742 = vmul.f32 %v738, %v740
        %v743 = vadd.f32 %v731, %v741
        %v744 = vadd.f32 %v732, %v742
        %v745 = vrot.slane %v727, 6
        %v746 = vrot.slane %v728, 6
        %v747 = vsel %vm404, %v745, %v746
        %v748 = vsel %vm404, %v746, %v745
        %v749 = vsel %vm346, %v748, 0.0
        %v750 = vsel %vm347, %v747, 0.0
        %s751 = sld [smem:[#allocation8 + $0x180]]
        %v752 = vstv %s751
        %v753 = vmul.f32 %v749, %v752
        %v754 = vmul.f32 %v750, %v752
        %v755 = vadd.f32 %v743, %v753
        %v756 = vadd.f32 %v744, %v754
        %757 = vrot.lane.b32.xlu0 %v727, 1
        %v758 = vpop.permute.xlu0 %757
        %759 = vrot.lane.b32.xlu0 %v728, 1
        %v760 = vpop.permute.xlu0 %759
        %v761 = vsel %vm351, %v758, 0.0
        %v762 = vsel %vm351, %v760, 0.0
        %s763 = sld [smem:[#allocation7 + $0x181]]
        %v764 = vstv %s763
        %v765 = vmul.f32 %v761, %v764
        %v766 = vmul.f32 %v762, %v764
        %v767 = vadd.f32 %v755, %v765
        %v768 = vadd.f32 %v756, %v766
        %v769 = vrot.slane %v727, 7
        %v770 = vrot.slane %v728, 7
        %v771 = vsel %vm429, %v769, %v770
        %v772 = vsel %vm429, %v770, %v769
        %v773 = vsel %vm358, %v772, 0.0
        %v774 = vsel %vm359, %v771, 0.0
        %s775 = sld [smem:[#allocation8 + $0x181]]
        %v776 = vstv %s775
        %v777 = vmul.f32 %v773, %v776
        %v778 = vmul.f32 %v774, %v776
        %v779 = vadd.f32 %v767, %v777
        %v780 = vadd.f32 %v768, %v778
        %s781 = sld [smem:[#allocation7 + $0x182]]
        %s782 = sld [smem:[#allocation8 + $0x182]]
        %s783 = sadd.f32 %s781, %s782
        %v784 = vstv %s783
        %v785 = vmul.f32 %v727, %v784
        %v786 = vmul.f32 %v728, %v784
        %v787 = vadd.f32 %v779, %v785
        %v788 = vadd.f32 %v780, %v786
        %789 = vrot.lane.b32.xlu0 %v727, 127
        %v790 = vpop.permute.xlu0 %789
        %791 = vrot.lane.b32.xlu0 %v728, 127
        %v792 = vpop.permute.xlu0 %791
        %v793 = vsel %vm363, %v790, 0.0
        %v794 = vsel %vm363, %v792, 0.0
        %s795 = sld [smem:[#allocation7 + $0x183]]
        %v796 = vstv %s795
        %v797 = vmul.f32 %v793, %v796
        %v798 = vmul.f32 %v794, %v796
        %v799 = vadd.f32 %v787, %v797
        %v800 = vadd.f32 %v788, %v798
        %v801 = vrot.slane %v727, 1
        %v802 = vrot.slane %v728, 1
        %v803 = vsel %vm462, %v801, %v802
        %v804 = vsel %vm462, %v802, %v801
        %v805 = vsel %vm370, %v803, 0.0
        %v806 = vsel %vm371, %v804, 0.0
        %s807 = sld [smem:[#allocation8 + $0x183]]
        %v808 = vstv %s807
        %v809 = vmul.f32 %v805, %v808
        %v810 = vmul.f32 %v806, %v808
        %v811 = vadd.f32 %v799, %v809
        %v812 = vadd.f32 %v800, %v810
        %813 = vrot.lane.b32.xlu0 %v727, 126
        %v814 = vpop.permute.xlu0 %813
        %815 = vrot.lane.b32.xlu0 %v728, 126
        %v816 = vpop.permute.xlu0 %815
        %v817 = vsel %vm375, %v814, 0.0
        %v818 = vsel %vm375, %v816, 0.0
        %s819 = sld [smem:[#allocation7 + $0x184]]
        %v820 = vstv %s819
        %v821 = vmul.f32 %v817, %v820
        %v822 = vmul.f32 %v818, %v820
        %v823 = vadd.f32 %v811, %v821
        %v824 = vadd.f32 %v812, %v822
        %v825 = vrot.slane %v727, 2
        %v826 = vrot.slane %v728, 2
        %v827 = vsel %vm487, %v825, %v826
        %v828 = vsel %vm487, %v826, %v825
        %v829 = vsel %vm382, %v827, 0.0
        %v830 = vsel %vm383, %v828, 0.0
        %s831 = sld [smem:[#allocation8 + $0x184]]
        %v832 = vstv %s831
        %v833 = vmul.f32 %v829, %v832
        %v834 = vmul.f32 %v830, %v832
        %v835 = vadd.f32 %v823, %v833
        %v836 = vadd.f32 %v824, %v834
        %v837 = vmax.f32 %v835, 0.0
        %v838 = vmax.f32 %v836, 0.0
        %s839 = sld [smem:[#allocation11]]
        %v840 = vstv %s839
        %v841 = vmul.f32 %v498, %v840
        %v842 = vmul.f32 %v499, %v840
        %s843 = sld [smem:[#allocation13]]
        %v844 = vstv %s843
        %v845 = vadd.f32 %v841, %v844
        %v846 = vadd.f32 %v842, %v844
        %s847 = sld [smem:[#allocation11 + $0x80]]
        %v848 = vstv %s847
        %v849 = vmul.f32 %v611, %v848
        %v850 = vmul.f32 %v612, %v848
        %v851 = vadd.f32 %v845, %v849
        %v852 = vadd.f32 %v846, %v850
        %s853 = sld [smem:[#allocation11 + $0x100]]
        %v854 = vstv %s853
        %v855 = vmul.f32 %v724, %v854
        %v856 = vmul.f32 %v725, %v854
        %v857 = vadd.f32 %v851, %v855
        %v858 = vadd.f32 %v852, %v856
        %s859 = sld [smem:[#allocation11 + $0x180]]
        %v860 = vstv %s859
        %v861 = vmul.f32 %v837, %v860
        %v862 = vmul.f32 %v838, %v860
        %v863 = vadd.f32 %v857, %v861
        %v864 = vadd.f32 %v858, %v862
        %865 = vst [vmem:[%s330] sm:$0xff] %v863
        %866 = vst [vmem:[%s330 + $0x8] sm:$0xff] %v864
        %s867 = sld [smem:[#allocation11 + $0x1]]
        %v868 = vstv %s867
        %v869 = vmul.f32 %v498, %v868
        %v870 = vmul.f32 %v499, %v868
        %s871 = sld [smem:[#allocation13 + $0x1]]
        %v872 = vstv %s871
        %v873 = vadd.f32 %v869, %v872
        %v874 = vadd.f32 %v870, %v872
        %s875 = sld [smem:[#allocation11 + $0x81]]
        %v876 = vstv %s875
        %v877 = vmul.f32 %v611, %v876
        %v878 = vmul.f32 %v612, %v876
        %v879 = vadd.f32 %v873, %v877
        %v880 = vadd.f32 %v874, %v878
        %s881 = sld [smem:[#allocation11 + $0x101]]
        %v882 = vstv %s881
        %v883 = vmul.f32 %v724, %v882
        %v884 = vmul.f32 %v725, %v882
        %v885 = vadd.f32 %v879, %v883
        %v886 = vadd.f32 %v880, %v884
        %s887 = sld [smem:[#allocation11 + $0x181]]
        %v888 = vstv %s887
        %v889 = vmul.f32 %v837, %v888
        %v890 = vmul.f32 %v838, %v888
        %v891 = vadd.f32 %v885, %v889
        %v892 = vadd.f32 %v886, %v890
        %s893 = scalar_lea.vmem %s330, 16 [#allocation14]
        %894 = vst [vmem:[%s893] sm:$0xff] %v891
        %895 = vst [vmem:[%s893 + $0x8] sm:$0xff] %v892
        %s896 = sld [smem:[#allocation11 + $0x2]]
        %v897 = vstv %s896
        %v898 = vmul.f32 %v498, %v897
        %v899 = vmul.f32 %v499, %v897
        %s900 = sld [smem:[#allocation13 + $0x2]]
        %v901 = vstv %s900
        %v902 = vadd.f32 %v898, %v901
        %v903 = vadd.f32 %v899, %v901
        %s904 = sld [smem:[#allocation11 + $0x82]]
        %v905 = vstv %s904
        %v906 = vmul.f32 %v611, %v905
        %v907 = vmul.f32 %v612, %v905
        %v908 = vadd.f32 %v902, %v906
        %v909 = vadd.f32 %v903, %v907
        %s910 = sld [smem:[#allocation11 + $0x102]]
        %v911 = vstv %s910
        %v912 = vmul.f32 %v724, %v911
        %v913 = vmul.f32 %v725, %v911
        %v914 = vadd.f32 %v908, %v912
        %v915 = vadd.f32 %v909, %v913
        %s916 = sld [smem:[#allocation11 + $0x182]]
        %v917 = vstv %s916
        %v918 = vmul.f32 %v837, %v917
        %v919 = vmul.f32 %v838, %v917
        %v920 = vadd.f32 %v914, %v918
        %v921 = vadd.f32 %v915, %v919
        %s922 = scalar_lea.vmem %s330, 32 [#allocation14]
        %923 = vst [vmem:[%s922] sm:$0xff] %v920
        %924 = vst [vmem:[%s922 + $0x8] sm:$0xff] %v921
        %s925 = sld [smem:[#allocation11 + $0x3]]
        %v926 = vstv %s925
        %v927 = vmul.f32 %v498, %v926
        %v928 = vmul.f32 %v499, %v926
        %s929 = sld [smem:[#allocation13 + $0x3]]
        %v930 = vstv %s929
        %v931 = vadd.f32 %v927, %v930
        %v932 = vadd.f32 %v928, %v930
        %s933 = sld [smem:[#allocation11 + $0x83]]
        %v934 = vstv %s933
        %v935 = vmul.f32 %v611, %v934
        %v936 = vmul.f32 %v612, %v934
        %v937 = vadd.f32 %v931, %v935
        %v938 = vadd.f32 %v932, %v936
        %s939 = sld [smem:[#allocation11 + $0x103]]
        %v940 = vstv %s939
        %v941 = vmul.f32 %v724, %v940
        %v942 = vmul.f32 %v725, %v940
        %v943 = vadd.f32 %v937, %v941
        %v944 = vadd.f32 %v938, %v942
        %s945 = sld [smem:[#allocation11 + $0x183]]
        %v946 = vstv %s945
        %v947 = vmul.f32 %v837, %v946
        %v948 = vmul.f32 %v838, %v946
        %v949 = vadd.f32 %v943, %v947
        %v950 = vadd.f32 %v944, %v948
        %s951 = scalar_lea.vmem %s330, 48 [#allocation14]
        %952 = vst [vmem:[%s951] sm:$0xff] %v949
        %953 = vst [vmem:[%s951 + $0x8] sm:$0xff] %v950
        %s954 = sld [smem:[#allocation11 + $0x4]]
        %v955 = vstv %s954
        %v956 = vmul.f32 %v498, %v955
        %v957 = vmul.f32 %v499, %v955
        %s958 = sld [smem:[#allocation13 + $0x4]]
        %v959 = vstv %s958
        %v960 = vadd.f32 %v956, %v959
        %v961 = vadd.f32 %v957, %v959
        %s962 = sld [smem:[#allocation11 + $0x84]]
        %v963 = vstv %s962
        %v964 = vmul.f32 %v611, %v963
        %v965 = vmul.f32 %v612, %v963
        %v966 = vadd.f32 %v960, %v964
        %v967 = vadd.f32 %v961, %v965
        %s968 = sld [smem:[#allocation11 + $0x104]]
        %v969 = vstv %s968
        %v970 = vmul.f32 %v724, %v969
        %v971 = vmul.f32 %v725, %v969
        %v972 = vadd.f32 %v966, %v970
        %v973 = vadd.f32 %v967, %v971
        %s974 = sld [smem:[#allocation11 + $0x184]]
        %v975 = vstv %s974
        %v976 = vmul.f32 %v837, %v975
        %v977 = vmul.f32 %v838, %v975
        %v978 = vadd.f32 %v972, %v976
        %v979 = vadd.f32 %v973, %v977
        %s980 = scalar_lea.vmem %s330, 64 [#allocation14]
        %981 = vst [vmem:[%s980] sm:$0xff] %v978
        %982 = vst [vmem:[%s980 + $0x8] sm:$0xff] %v979
        %s983 = sld [smem:[#allocation11 + $0x5]]
        %v984 = vstv %s983
        %v985 = vmul.f32 %v498, %v984
        %v986 = vmul.f32 %v499, %v984
        %s987 = sld [smem:[#allocation13 + $0x5]]
        %v988 = vstv %s987
        %v989 = vadd.f32 %v985, %v988
        %v990 = vadd.f32 %v986, %v988
        %s991 = sld [smem:[#allocation11 + $0x85]]
        %v992 = vstv %s991
        %v993 = vmul.f32 %v611, %v992
        %v994 = vmul.f32 %v612, %v992
        %v995 = vadd.f32 %v989, %v993
        %v996 = vadd.f32 %v990, %v994
        %s997 = sld [smem:[#allocation11 + $0x105]]
        %v998 = vstv %s997
        %v999 = vmul.f32 %v724, %v998
        %v1000 = vmul.f32 %v725, %v998
        %v1001 = vadd.f32 %v995, %v999
        %v1002 = vadd.f32 %v996, %v1000
        %s1003 = sld [smem:[#allocation11 + $0x185]]
        %v1004 = vstv %s1003
        %v1005 = vmul.f32 %v837, %v1004
        %v1006 = vmul.f32 %v838, %v1004
        %v1007 = vadd.f32 %v1001, %v1005
        %v1008 = vadd.f32 %v1002, %v1006
        %s1009 = scalar_lea.vmem %s330, 80 [#allocation14]
        %1010 = vst [vmem:[%s1009] sm:$0xff] %v1007
        %1011 = vst [vmem:[%s1009 + $0x8] sm:$0xff] %v1008
        %s1012 = sld [smem:[#allocation11 + $0x6]]
        %v1013 = vstv %s1012
        %v1014 = vmul.f32 %v498, %v1013
        %v1015 = vmul.f32 %v499, %v1013
        %s1016 = sld [smem:[#allocation13 + $0x6]]
        %v1017 = vstv %s1016
        %v1018 = vadd.f32 %v1014, %v1017
        %v1019 = vadd.f32 %v1015, %v1017
        %s1020 = sld [smem:[#allocation11 + $0x86]]
        %v1021 = vstv %s1020
        %v1022 = vmul.f32 %v611, %v1021
        %v1023 = vmul.f32 %v612, %v1021
        %v1024 = vadd.f32 %v1018, %v1022
        %v1025 = vadd.f32 %v1019, %v1023
        %s1026 = sld [smem:[#allocation11 + $0x106]]
        %v1027 = vstv %s1026
        %v1028 = vmul.f32 %v724, %v1027
        %v1029 = vmul.f32 %v725, %v1027
        %v1030 = vadd.f32 %v1024, %v1028
        %v1031 = vadd.f32 %v1025, %v1029
        %s1032 = sld [smem:[#allocation11 + $0x186]]
        %v1033 = vstv %s1032
        %v1034 = vmul.f32 %v837, %v1033
        %v1035 = vmul.f32 %v838, %v1033
        %v1036 = vadd.f32 %v1030, %v1034
        %v1037 = vadd.f32 %v1031, %v1035
        %s1038 = scalar_lea.vmem %s330, 96 [#allocation14]
        %1039 = vst [vmem:[%s1038] sm:$0xff] %v1036
        %1040 = vst [vmem:[%s1038 + $0x8] sm:$0xff] %v1037
        %s1041 = sld [smem:[#allocation11 + $0x7]]
        %v1042 = vstv %s1041
        %v1043 = vmul.f32 %v498, %v1042
        %v1044 = vmul.f32 %v499, %v1042
        %s1045 = sld [smem:[#allocation13 + $0x7]]
        %v1046 = vstv %s1045
        %v1047 = vadd.f32 %v1043, %v1046
        %v1048 = vadd.f32 %v1044, %v1046
        %s1049 = sld [smem:[#allocation11 + $0x87]]
        %v1050 = vstv %s1049
        %v1051 = vmul.f32 %v611, %v1050
        %v1052 = vmul.f32 %v612, %v1050
        %v1053 = vadd.f32 %v1047, %v1051
        %v1054 = vadd.f32 %v1048, %v1052
        %s1055 = sld [smem:[#allocation11 + $0x107]]
        %v1056 = vstv %s1055
        %v1057 = vmul.f32 %v724, %v1056
        %v1058 = vmul.f32 %v725, %v1056
        %v1059 = vadd.f32 %v1053, %v1057
        %v1060 = vadd.f32 %v1054, %v1058
        %s1061 = sld [smem:[#allocation11 + $0x187]]
        %v1062 = vstv %s1061
        %v1063 = vmul.f32 %v837, %v1062
        %v1064 = vmul.f32 %v838, %v1062
        %v1065 = vadd.f32 %v1059, %v1063
        %v1066 = vadd.f32 %v1060, %v1064
        %s1067 = scalar_lea.vmem %s330, 112 [#allocation14]
        %1068 = vst [vmem:[%s1067] sm:$0xff] %v1065
        %1069 = vst [vmem:[%s1067 + $0x8] sm:$0xff] %v1066
        %s1070 = sand.u32 %s166, 1
        %s1071 = scalar_lea.sflag [#allocation4], %s1070
        %s1072 = sand.u32 %s166, 1
        %s1073 = smul.addr %s1072, 128
        %s1074 = scalar_lea.vmem [#allocation14], %s1073
        // Predicated region
        $region69: #{tpu_custom_call.1} parent=43 // pred_check
          %p1075 = pneg %p176
        $region70: #{tpu_custom_call.1} parent=43 // pred_check_branch
          %1077 = sbr.rel (%p1075) target = $region72
        $region71: #{tpu_custom_call.1} parent=43 // pred_region
          %s1079 = ssub.s32 2048, 2048
          %1080 = vsyncadd %s1071, %s1079
          %s1081 = smul.addr %s27, 16
          %s1082 = smul.addr %s1081, 128
          %s1083 = scalar_lea.hbm %s6, %s1082
          %s1084 = sshll.u32 %s1074, 4
          %s1085 = int_to_ptr.vmem [resolvable:$true] %s1084
          %1090 = dma.vmem_to_hbm [thread:$0]  %s1085, 2048, %s1083, %s1071, 128, 128, 8
        $region72: #{tpu_custom_call.1} parent=43 // pred_fallthru
          _
      $region44: #{tpu_custom_call.1} parent=5 // pred_fallthru
        _
      %p1091 = scmp.le.s32.totalorder 2, %s22
      // Predicated region
      $region73: #{tpu_custom_call.1} parent=5 // pred_check
        %p1092 = pneg %p1091
      $region74: #{tpu_custom_call.1} parent=5 // pred_check_branch
        %1094 = sbr.rel (%p1092) target = $region76
      $region75: #{tpu_custom_call.1} parent=5 // pred_region
        %s1095 = ssub.s32 %s22, 2
        // Predicated region
        $region77: #{tpu_custom_call.1} parent=75 // pred_check
          %p1096 = pneg %p182
        $region78: #{tpu_custom_call.1} parent=75 // pred_check_branch
          %1098 = sbr.rel (%p1096) target = $region80
        $region79: #{tpu_custom_call.1} parent=75 // pred_region
          %s1099 = sand.u32 %s167, 1
          %s1100 = scalar_lea.sflag [#allocation4], %s1099
          %s1101 = sand.u32 %s167, 1
          %s1102 = smul.addr %s1101, 128
          %s1103 = scalar_lea.vmem [#allocation14], %s1102
          %1104 = dma.done %s1100, 2048
        $region80: #{tpu_custom_call.1} parent=75 // pred_fallthru
          _
      $region76: #{tpu_custom_call.1} parent=5 // pred_fallthru
        _
    $region6: #{tpu_custom_call.1} parent=1 // loop_footer
      %s26 = sadd.s32 1, %s22
    $region7: #{tpu_custom_call.1} parent=1 // loop_footer_branch
      %21 = sbr.rel target = $region3
    $region8: #{tpu_custom_call.1} parent=1 // loop_exit
      _
    %1105 = vsyncpa [#allocation3], 1
    %s1106 = scalar_lea.sflag [#allocation3], 1
    %1107 = vsyncpa %s1106, 1
    %1108 = vsyncpa [#allocation4], 1
    %s1109 = scalar_lea.sflag [#allocation4], 1
    %1110 = vsyncpa %s1109, 1
    %1111 = vsyncpa [#allocation5], 1
    %s1112 = scalar_lea.sflag [#allocation5], 1
    %1113 = vsyncpa %s1112, 1
    %1114 = vsyncpa [#allocation9], 1
    %1115 = vsyncpa [#allocation6], 1
    %s1116 = scalar_lea.sflag [#allocation6], 1
    %1117 = vsyncpa %s1116, 1
    %1118 = vsyncpa [#allocation12], 1

</llo_original>
